<compile_context>
chip_gen: v7x
topology: tpu7x:2x2x1
jax: 0.10.0
libtpu: 0.0.40
codegen_flags: <defaults>
</compile_context>

<pallas_src>
import functools

import jax
import jax.numpy as jnp
from jax.experimental import pallas as pl
from jax.experimental.pallas import tpu as pltpu

LANE = 128      # TPU lane width (last-dim tile)


def _round_up(n, m):
    return ((n + m - 1) // m) * m


# -----------------------------------------------------------------------------
# Kernel A: conv1 -> ReLU -> BN1 -> conv2 -> ReLU -> BN2   (one batch row / step)
# -----------------------------------------------------------------------------
def conv_bn_kernel(x_ref, w1_ref, b1_ref, s1_ref, t1_ref,
                   w2_ref, b2_ref, s2_ref, t2_ref, o_ref, *, c1):
    """One batch row.

    x_ref : (1, L, K1_p)  bf16  im2col'd conv1 input (3*Cin real lanes).
    w1_ref: (K1_p, C1_p)  bf16  conv1 weights; output channels replicated at
                                lane offsets 0, c1, 2*c1.
    w2_ref: (C1_p, C2_p)  bf16  conv2 weights packed: row k*c1 + c holds tap k.
    b*/s*/t*: (1, C)      f32   bias / folded-BN scale / shift rows.
    o_ref : (1, L2, C2)   bf16  conv2 output, real channels only.
    """
    L2 = o_ref.shape[1]
    C2 = o_ref.shape[2]

    x = x_ref[0]                                                     # (L, K1_p) bf16

    # conv1 (k=3, 'same'): single MXU matmul thanks to wrapper-side im2col.
    h1 = jnp.dot(x, w1_ref[...], preferred_element_type=jnp.float32)
    h1 = jnp.maximum(h1 + b1_ref[...], 0.0)                          # bias + ReLU
    h1 = h1 * s1_ref[...] + t1_ref[...]                              # BN1 (eval, folded)
    h1 = h1.astype(jnp.bfloat16)                                     # single hoisted cast

    # conv2 (k=3, valid): lane-select the 3 shifted taps into lane groups
    # [0,c1), [c1,2c1), [2c1,3c1) (conv1 output is replicated there), then one matmul.
    lanes = jax.lax.broadcasted_iota(jnp.int32, (L2, h1.shape[1]), 1)
    packed = jnp.where(lanes < c1, h1[0:L2],
                       jnp.where(lanes < 2 * c1, h1[1:L2 + 1], h1[2:L2 + 2]))
    h2 = jnp.dot(packed, w2_ref[...], preferred_element_type=jnp.float32)
    h2 = jnp.maximum(h2 + b2_ref[...], 0.0)
    h2 = h2 * s2_ref[...] + t2_ref[...]

    o_ref[0] = h2[:, :C2].astype(o_ref.dtype)                        # real channels only


# -----------------------------------------------------------------------------
# Kernel B: flatten -> fc1 -> fc4 head (lane-dense, padded class dim)
# -----------------------------------------------------------------------------
def mlp_head_kernel(a_ref, wf1_ref, bf1_ref, wf4_ref, bf4_ref, o_ref):
    a = a_ref[...]                                                   # (B, F_p) bf16
    h = jnp.dot(a, wf1_ref[...], preferred_element_type=jnp.float32) + bf1_ref[...]
    out = jnp.dot(h.astype(jnp.bfloat16), wf4_ref[...],
                  preferred_element_type=jnp.float32) + bf4_ref[...]
    o_ref[...] = out.astype(o_ref.dtype)


# -----------------------------------------------------------------------------
# Parameters (PyTorch-style logical layout) and kernel-layout preparation
# -----------------------------------------------------------------------------
def init_params(key, in_channels, hidden_channels, num_hiddens, num_classes, length):
    """PyTorch-Linear/Conv1d-style init (U[-1/sqrt(fan_in), 1/sqrt(fan_in)])."""
    C1 = hidden_channels
    C2 = hidden_channels * 2
    L2 = length - 2                 # conv2 output length (== 113 for length 115)
    F = L2 * C2                     # fc1 in_features == 113 * hidden_channels * 2
    ks = jax.random.split(key, 16)

    def unif(k, shape, fan_in):
        bound = 1.0 / (fan_in ** 0.5)
        return jax.random.uniform(k, shape, jnp.float32, -bound, bound)

    return dict(
        conv1_w=unif(ks[0], (C1, in_channels, 3), in_channels * 3),
        conv1_b=unif(ks[1], (C1,), in_channels * 3),
        conv2_w=unif(ks[2], (C2, C1, 3), C1 * 3),
        conv2_b=unif(ks[3], (C2,), C1 * 3),
        fc1_w=unif(ks[4], (num_hiddens, F), F),
        fc1_b=unif(ks[5], (num_hiddens,), F),
        fc4_w=unif(ks[6], (num_classes, num_hiddens), num_hiddens),
        fc4_b=unif(ks[7], (num_classes,), num_hiddens),
        # BatchNorm1d eval-mode stats/affine (randomized so the BN path is exercised).
        bn1_gamma=1.0 + 0.1 * jax.random.normal(ks[8], (C1,), jnp.float32),
        bn1_beta=0.1 * jax.random.normal(ks[9], (C1,), jnp.float32),
        bn1_mean=0.1 * jax.random.normal(ks[10], (C1,), jnp.float32),
        bn1_var=1.0 + 0.1 * jax.random.uniform(ks[11], (C1,), jnp.float32),
        bn2_gamma=1.0 + 0.1 * jax.random.normal(ks[12], (C2,), jnp.float32),
        bn2_beta=0.1 * jax.random.normal(ks[13], (C2,), jnp.float32),
        bn2_mean=0.1 * jax.random.normal(ks[14], (C2,), jnp.float32),
        bn2_var=1.0 + 0.1 * jax.random.uniform(ks[15], (C2,), jnp.float32),
    )


def prepare_kernel_params(p, eps=1e-5, weight_dtype=jnp.bfloat16):
    """Pack torch-layout params into the lane-dense kernel layout."""
    C1, Cin, _ = p['conv1_w'].shape
    C2 = p['conv2_w'].shape[0]
    H, F = p['fc1_w'].shape
    NC = p['fc4_w'].shape[0]
    L2 = F // C2

    K1 = 3 * Cin                          # im2col'd conv1 contraction (real lanes)
    # TODO(synk): fall back to 3 separate tap matmuls if 3*Cin or 3*C1 exceed 128 lanes.
    assert K1 <= LANE and 3 * C1 <= LANE

    K1_p = _round_up(K1, LANE)
    C1_p = _round_up(3 * C1, LANE)        # conv1 output lanes (3 replicated groups)
    C2_p = _round_up(C2, LANE)
    H_p = _round_up(H, LANE)
    NC_p = _round_up(NC, LANE)
    F_real = L2 * C2                      # 8x smaller than the old padded 113*128
    F_p = _round_up(F_real, LANE)

    def pad_to(a, shape):
        return jnp.pad(a, [(0, t - s) for s, t in zip(a.shape, shape)])

    def row(v, n):                                   # (C,) -> zero-padded (1, n) f32
        return pad_to(v.astype(jnp.float32)[None, :], (1, n))

    def row3(v, n):                                  # replicate 3x along lanes, pad
        return pad_to(jnp.tile(v.astype(jnp.float32), 3)[None, :], (1, n))

    # conv1: im2col weight  w1t[k*Cin + c, o] = conv1_w[o, c, k];
    # output channels replicated 3x along lanes for the conv2 tap packing.
    w1t = jnp.transpose(p['conv1_w'], (2, 1, 0)).reshape(K1, C1)
    w1 = pad_to(jnp.concatenate([w1t, w1t, w1t], axis=1), (K1_p, C1_p)).astype(weight_dtype)

    # conv2: packed weight  w2p[k*C1 + c, o] = conv2_w[o, c, k].
    w2t = jnp.transpose(p['conv2_w'], (2, 1, 0)).reshape(3 * C1, C2)
    w2 = pad_to(w2t, (C1_p, C2_p)).astype(weight_dtype)

    # Fold eval-mode BatchNorm into per-channel scale/shift (zeros in pad lanes).
    s1 = p['bn1_gamma'] / jnp.sqrt(p['bn1_var'] + eps)
    t1 = p['bn1_beta'] - p['bn1_mean'] * s1
    s2 = p['bn2_gamma'] / jnp.sqrt(p['bn2_var'] + eps)
    t2 = p['bn2_beta'] - p['bn2_mean'] * s2

    # fc1: torch flatten is (channel, position); kernel flatten is (position, channel):
    #   wf1[l*C2 + c, h] = fc1_w[h, c*L2 + l].   No pad-channel rows (F shrinks 8x).
    wf1 = jnp.transpose(p['fc1_w'].reshape(H, C2, L2), (2, 1, 0)).reshape(F_real, H)
    wf1 = pad_to(wf1, (F_p, H_p)).astype(weight_dtype)

    wf4 = pad_to(jnp.transpose(p['fc4_w'], (1, 0)), (H_p, NC_p)).astype(weight_dtype)

    return dict(
        w1=w1, b1=row3(p['conv1_b'], C1_p), s1=row3(s1, C1_p), t1=row3(t1, C1_p),
        w2=w2, b2=row(p['conv2_b'], C2_p), s2=row(s2, C2_p), t2=row(t2, C2_p),
        wf1=wf1, bf1=row(p['fc1_b'], H_p),
        wf4=wf4, bf4=row(p['fc4_b'], NC_p),
        dims=dict(C1=C1, C2=C2, Cin=Cin, K1=K1, K1_p=K1_p,
                  NC=NC, NC_p=NC_p, L2=L2, F_p=F_p),
    )


# -----------------------------------------------------------------------------
# Forward wrapper
# -----------------------------------------------------------------------------
def cnn_forward(x, kp):
    """x: (B, Cin, L) float32, channels-first like torch Conv1d. Returns (B, num_classes)."""
    d = kp['dims']
    B, Cin, L = x.shape
    L2 = L - 2
    assert L2 == d['L2'] and Cin == d['Cin'], "input shape inconsistent with fc1 in_features"

    # bf16 channels-last input, 'same' halo, im2col of the 3 conv1 taps, lane pad.
    xt = jnp.transpose(x, (0, 2, 1)).astype(jnp.bfloat16)              # (B, L, Cin)
    xs = jnp.pad(xt, ((0, 0), (1, 1), (0, 0)))                         # (B, L+2, Cin)
    xim = jnp.concatenate([xs[:, k:k + L, :] for k in range(3)], -1)   # (B, L, 3*Cin)
    xim = jnp.pad(xim, ((0, 0), (0, 0), (0, d['K1_p'] - d['K1'])))     # (B, L, K1_p)

    const2 = lambda i: (0, 0)

    # ---- Stage A: conv / ReLU / BN, one *real* batch row per grid step ------
    a2 = pl.pallas_call(
        functools.partial(conv_bn_kernel, c1=d['C1']),
        out_shape=jax.ShapeDtypeStruct((B, L2, d['C2']), jnp.bfloat16),
        grid=(B,),
        in_specs=[
            pl.BlockSpec((1, L, d['K1_p']), lambda i: (i, 0, 0)),
            pl.BlockSpec(kp['w1'].shape, const2),
            pl.BlockSpec(kp['b1'].shape, const2),
            pl.BlockSpec(kp['s1'].shape, const2),
            pl.BlockSpec(kp['t1'].shape, const2),
            pl.BlockSpec(kp['w2'].shape, const2),
            pl.BlockSpec(kp['b2'].shape, const2),
            pl.BlockSpec(kp['s2'].shape, const2),
            pl.BlockSpec(kp['t2'].shape, const2),
        ],
        out_specs=pl.BlockSpec((1, L2, d['C2']), lambda i: (i, 0, 0)),
        compiler_params=pltpu.CompilerParams(dimension_semantics=("parallel",)),
    )(xim, kp['w1'], kp['b1'], kp['s1'], kp['t1'],
      kp['w2'], kp['b2'], kp['s2'], kp['t2'])

    # Flatten (position, channel) -> features (free XLA reshape; no pad channels),
    # then zero-pad the feature dim to a lane multiple (wf1's pad rows are zero).
    feats = a2.reshape(B, L2 * d['C2'])
    feats = jnp.pad(feats, ((0, 0), (0, d['F_p'] - L2 * d['C2'])))

    # ---- Stage B: fc1 -> fc4 head, lane-dense padded class output -----------
    logits_p = pl.pallas_call(
        mlp_head_kernel,
        out_shape=jax.ShapeDtypeStruct((B, d['NC_p']), jnp.float32),
        grid=(1,),
        in_specs=[
            pl.BlockSpec((B, d['F_p']), lambda i: (0, 0)),
            pl.BlockSpec(kp['wf1'].shape, const2),
            pl.BlockSpec(kp['bf1'].shape, const2),
            pl.BlockSpec(kp['wf4'].shape, const2),
            pl.BlockSpec(kp['bf4'].shape, const2),
        ],
        out_specs=pl.BlockSpec((B, d['NC_p']), lambda i: (0, 0)),
        compiler_params=pltpu.CompilerParams(dimension_semantics=("arbitrary",)),
    )(feats, kp['wf1'], kp['bf1'], kp['wf4'], kp['bf4'])

    return logits_p[:, :d['NC']]


# -----------------------------------------------------------------------------
# Plain-JAX reference (torch layout), mimicking the kernel's bf16/f32 numerics
# -----------------------------------------------------------------------------
def reference_forward(x, p, eps=1e-5):
    f32 = jnp.float32
    hi = jax.lax.Precision.HIGHEST
    bf = lambda v: v.astype(jnp.bfloat16).astype(f32)

    B, Cin, L = x.shape
    # conv1 ('same') + ReLU + BN1 (eval)
    xp = bf(jnp.pad(x, ((0, 0), (0, 0), (1, 1))))
    w1 = bf(p['conv1_w'])
    h1 = sum(jnp.einsum('bcl,oc->bol', xp[:, :, k:k + L], w1[:, :, k], precision=hi)
             for k in range(3))
    h1 = jnp.maximum(h1 + p['conv1_b'][None, :, None], 0.0)
    s1 = p['bn1_gamma'] / jnp.sqrt(p['bn1_var'] + eps)
    t1 = p['bn1_beta'] - p['bn1_mean'] * s1
    h1 = h1 * s1[None, :, None] + t1[None, :, None]

    # conv2 (valid) + ReLU + BN2 (eval)
    L2 = L - 2
    a1 = bf(h1)
    w2 = bf(p['conv2_w'])
    h2 = sum(jnp.einsum('bcl,oc->bol', a1[:, :, k:k + L2], w2[:, :, k], precision=hi)
             for k in range(3))
    h2 = jnp.maximum(h2 + p['conv2_b'][None, :, None], 0.0)
    s2 = p['bn2_gamma'] / jnp.sqrt(p['bn2_var'] + eps)
    t2 = p['bn2_beta'] - p['bn2_mean'] * s2
    h2 = h2 * s2[None, :, None] + t2[None, :, None]

    # torch.flatten(x, 1) (channel-major) -> fc1 -> fc4 (no activation between)
    feat = bf(h2).reshape(B, -1)
    h3 = jnp.dot(feat, bf(p['fc1_w']).T, precision=hi) + p['fc1_b'][None, :]
    out = jnp.dot(bf(h3), bf(p['fc4_w']).T, precision=hi) + p['fc4_b'][None, :]
    return out


if __name__ == "__main__":
    key = jax.random.PRNGKey(0)
    k_x, k_p = jax.random.split(key)

    # Small shapes consistent with the module.  fc1 expects 113 * hidden_channels * 2
    # input features, which forces input length 115 (conv1 'same', conv2 valid, k=3).
    B, in_channels, length = 2, 4, 115
    hidden_channels, num_hiddens, num_classes = 8, 32, 10

    x = jax.random.normal(k_x, (B, in_channels, length), jnp.float32)
    params = init_params(k_p, in_channels, hidden_channels, num_hiddens,
                         num_classes, length)
    kparams = prepare_kernel_params(params)

    forward = jax.jit(lambda xx: cnn_forward(xx, kparams))
    out = jax.block_until_ready(forward(x))

    ref = reference_forward(x, params)
    assert out.shape == (B, num_classes)
    err = jnp.max(jnp.abs(out - ref))
    assert jnp.allclose(out, ref, atol=1e-2, rtol=1e-2), f"max abs err {err}"

    print("KERNEL_OK")
</pallas_src>

<mosaic_0001>
module attributes {stable_mosaic.version = 11 : i64} {
  func.func @conv_bn_kernel(%arg0: i32, %arg1: memref<1x115x128xbf16, #tpu.memory_space<vmem>>, %arg2: memref<128x128xbf16, #tpu.memory_space<vmem>>, %arg3: memref<1x128xf32, #tpu.memory_space<vmem>>, %arg4: memref<1x128xf32, #tpu.memory_space<vmem>>, %arg5: memref<1x128xf32, #tpu.memory_space<vmem>>, %arg6: memref<128x128xbf16, #tpu.memory_space<vmem>>, %arg7: memref<1x128xf32, #tpu.memory_space<vmem>>, %arg8: memref<1x128xf32, #tpu.memory_space<vmem>>, %arg9: memref<1x128xf32, #tpu.memory_space<vmem>>, %arg10: memref<1x113x16xbf16, #tpu.memory_space<vmem>>) attributes {dimension_semantics = [#tpu.dimension_semantics<parallel>], iteration_bounds = array<i64: 2>, scalar_prefetch = 0 : i64, scratch_operands = 0 : i64, tpu.core_type = #tpu.core_type<tc>, window_params = [{transform_indices = @transform_0, window_bounds = array<i64: 1, 115, 128>}, {pipeline_mode = #tpu.pipeline_mode<synchronous>, transform_indices = @transform_1, window_bounds = array<i64: 128, 128>}, {pipeline_mode = #tpu.pipeline_mode<synchronous>, transform_indices = @transform_2, window_bounds = array<i64: 1, 128>}, {pipeline_mode = #tpu.pipeline_mode<synchronous>, transform_indices = @transform_3, window_bounds = array<i64: 1, 128>}, {pipeline_mode = #tpu.pipeline_mode<synchronous>, transform_indices = @transform_4, window_bounds = array<i64: 1, 128>}, {pipeline_mode = #tpu.pipeline_mode<synchronous>, transform_indices = @transform_5, window_bounds = array<i64: 128, 128>}, {pipeline_mode = #tpu.pipeline_mode<synchronous>, transform_indices = @transform_6, window_bounds = array<i64: 1, 128>}, {pipeline_mode = #tpu.pipeline_mode<synchronous>, transform_indices = @transform_7, window_bounds = array<i64: 1, 128>}, {pipeline_mode = #tpu.pipeline_mode<synchronous>, transform_indices = @transform_8, window_bounds = array<i64: 1, 128>}, {transform_indices = @transform_9, window_bounds = array<i64: 1, 113, 16>}]} {
    %c0 = arith.constant 0 : index
    %c0_0 = arith.constant 0 : index
    %c0_1 = arith.constant 0 : index
    %0 = vector.load %arg1[%c0, %c0_0, %c0_1] : memref<1x115x128xbf16, #tpu.memory_space<vmem>>, vector<1x115x128xbf16>
    %1 = vector.shape_cast %0 : vector<1x115x128xbf16> to vector<115x128xbf16>
    %c0_2 = arith.constant 0 : index
    %c0_3 = arith.constant 0 : index
    %2 = vector.load %arg2[%c0_2, %c0_3] : memref<128x128xbf16, #tpu.memory_space<vmem>>, vector<128x128xbf16>
    %cst = arith.constant dense<0.000000e+00> : vector<115x128xf32>
    %3 = tpu.matmul %1, %2, %cst {dimension_numbers = #tpu.dot_dimension_numbers<[1], [0], [0], [1], [0, 0, 1, 1], [], []>} : vector<115x128xbf16>, vector<128x128xbf16>, vector<115x128xf32> -> vector<115x128xf32>
    %c0_4 = arith.constant 0 : index
    %c0_5 = arith.constant 0 : index
    %4 = vector.load %arg3[%c0_4, %c0_5] : memref<1x128xf32, #tpu.memory_space<vmem>>, vector<1x128xf32>
    %5 = vector.broadcast %4 : vector<1x128xf32> to vector<115x128xf32>
    %6 = arith.addf %3, %5 : vector<115x128xf32>
    %cst_6 = arith.constant 0.000000e+00 : f32
    %7 = vector.broadcast %cst_6 : f32 to vector<115x128xf32>
    %8 = arith.maximumf %6, %7 : vector<115x128xf32>
    %c0_7 = arith.constant 0 : index
    %c0_8 = arith.constant 0 : index
    %9 = vector.load %arg4[%c0_7, %c0_8] : memref<1x128xf32, #tpu.memory_space<vmem>>, vector<1x128xf32>
    %10 = vector.broadcast %9 : vector<1x128xf32> to vector<115x128xf32>
    %11 = arith.mulf %8, %10 : vector<115x128xf32>
    %c0_9 = arith.constant 0 : index
    %c0_10 = arith.constant 0 : index
    %12 = vector.load %arg5[%c0_9, %c0_10] : memref<1x128xf32, #tpu.memory_space<vmem>>, vector<1x128xf32>
    %13 = vector.broadcast %12 : vector<1x128xf32> to vector<115x128xf32>
    %14 = arith.addf %11, %13 : vector<115x128xf32>
    %15 = arith.truncf %14 : vector<115x128xf32> to vector<115x128xbf16>
    %16 = tpu.iota {dimensions = array<i32: 1>} : vector<113x128xi32>
    %c8_i32 = arith.constant 8 : i32
    %17 = vector.broadcast %c8_i32 : i32 to vector<113x128xi32>
    %18 = arith.cmpi slt, %16, %17 : vector<113x128xi32>
    %19 = vector.extract_strided_slice %15 {offsets = [0, 0], sizes = [113, 128], strides = [1, 1]} : vector<115x128xbf16> to vector<113x128xbf16>
    %c16_i32 = arith.constant 16 : i32
    %20 = vector.broadcast %c16_i32 : i32 to vector<113x128xi32>
    %21 = arith.cmpi slt, %16, %20 : vector<113x128xi32>
    %22 = vector.extract_strided_slice %15 {offsets = [1, 0], sizes = [113, 128], strides = [1, 1]} : vector<115x128xbf16> to vector<113x128xbf16>
    %23 = vector.extract_strided_slice %15 {offsets = [2, 0], sizes = [113, 128], strides = [1, 1]} : vector<115x128xbf16> to vector<113x128xbf16>
    %24 = arith.select %21, %22, %23 : vector<113x128xi1>, vector<113x128xbf16>
    %25 = arith.select %18, %19, %24 : vector<113x128xi1>, vector<113x128xbf16>
    %c0_11 = arith.constant 0 : index
    %c0_12 = arith.constant 0 : index
    %26 = vector.load %arg6[%c0_11, %c0_12] : memref<128x128xbf16, #tpu.memory_space<vmem>>, vector<128x128xbf16>
    %cst_13 = arith.constant dense<0.000000e+00> : vector<113x128xf32>
    %27 = tpu.matmul %25, %26, %cst_13 {dimension_numbers = #tpu.dot_dimension_numbers<[1], [0], [0], [1], [0, 0, 1, 1], [], []>} : vector<113x128xbf16>, vector<128x128xbf16>, vector<113x128xf32> -> vector<113x128xf32>
    %c0_14 = arith.constant 0 : index
    %c0_15 = arith.constant 0 : index
    %28 = vector.load %arg7[%c0_14, %c0_15] : memref<1x128xf32, #tpu.memory_space<vmem>>, vector<1x128xf32>
    %29 = vector.broadcast %28 : vector<1x128xf32> to vector<113x128xf32>
    %30 = arith.addf %27, %29 : vector<113x128xf32>
    %cst_16 = arith.constant 0.000000e+00 : f32
    %31 = vector.broadcast %cst_16 : f32 to vector<113x128xf32>
    %32 = arith.maximumf %30, %31 : vector<113x128xf32>
    %c0_17 = arith.constant 0 : index
    %c0_18 = arith.constant 0 : index
    %33 = vector.load %arg8[%c0_17, %c0_18] : memref<1x128xf32, #tpu.memory_space<vmem>>, vector<1x128xf32>
    %34 = vector.broadcast %33 : vector<1x128xf32> to vector<113x128xf32>
    %35 = arith.mulf %32, %34 : vector<113x128xf32>
    %c0_19 = arith.constant 0 : index
    %c0_20 = arith.constant 0 : index
    %36 = vector.load %arg9[%c0_19, %c0_20] : memref<1x128xf32, #tpu.memory_space<vmem>>, vector<1x128xf32>
    %37 = vector.broadcast %36 : vector<1x128xf32> to vector<113x128xf32>
    %38 = arith.addf %35, %37 : vector<113x128xf32>
    %39 = vector.extract_strided_slice %38 {offsets = [0, 0], sizes = [113, 16], strides = [1, 1]} : vector<113x128xf32> to vector<113x16xf32>
    %40 = arith.truncf %39 : vector<113x16xf32> to vector<113x16xbf16>
    %c0_21 = arith.constant 0 : index
    %c0_22 = arith.constant 0 : index
    %c0_23 = arith.constant 0 : index
    %41 = vector.load %arg10[%c0_21, %c0_22, %c0_23] : memref<1x113x16xbf16, #tpu.memory_space<vmem>>, vector<1x113x16xbf16>
    %42 = vector.shape_cast %41 : vector<1x113x16xbf16> to vector<113x16xbf16>
    %43 = vector.shape_cast %40 : vector<113x16xbf16> to vector<1x113x16xbf16>
    tpu.vector_store %arg10[%c0_21, %c0_22, %c0_23], %43 {strides = array<i32>} : memref<1x113x16xbf16, #tpu.memory_space<vmem>>, vector<1x113x16xbf16>,
    return
  }
  func.func @transform_0(%arg0: i32) -> (i32, i32, i32) {
    %c0_i32 = arith.constant 0 : i32
    %c0_i32_0 = arith.constant 0 : i32
    %c0_i32_1 = arith.constant 0 : i32
    return %arg0, %c0_i32, %c0_i32_0 : i32, i32, i32
  }
  func.func @transform_1(%arg0: i32) -> (i32, i32) {
    %c0_i32 = arith.constant 0 : i32
    %c0_i32_0 = arith.constant 0 : i32
    %c0_i32_1 = arith.constant 0 : i32
    return %c0_i32, %c0_i32_0 : i32, i32
  }
  func.func @transform_2(%arg0: i32) -> (i32, i32) {
    %c0_i32 = arith.constant 0 : i32
    %c0_i32_0 = arith.constant 0 : i32
    %c0_i32_1 = arith.constant 0 : i32
    return %c0_i32, %c0_i32_0 : i32, i32
  }
  func.func @transform_3(%arg0: i32) -> (i32, i32) {
    %c0_i32 = arith.constant 0 : i32
    %c0_i32_0 = arith.constant 0 : i32
    %c0_i32_1 = arith.constant 0 : i32
    return %c0_i32, %c0_i32_0 : i32, i32
  }
  func.func @transform_4(%arg0: i32) -> (i32, i32) {
    %c0_i32 = arith.constant 0 : i32
    %c0_i32_0 = arith.constant 0 : i32
    %c0_i32_1 = arith.constant 0 : i32
    return %c0_i32, %c0_i32_0 : i32, i32
  }
  func.func @transform_5(%arg0: i32) -> (i32, i32) {
    %c0_i32 = arith.constant 0 : i32
    %c0_i32_0 = arith.constant 0 : i32
    %c0_i32_1 = arith.constant 0 : i32
    return %c0_i32, %c0_i32_0 : i32, i32
  }
  func.func @transform_6(%arg0: i32) -> (i32, i32) {
    %c0_i32 = arith.constant 0 : i32
    %c0_i32_0 = arith.constant 0 : i32
    %c0_i32_1 = arith.constant 0 : i32
    return %c0_i32, %c0_i32_0 : i32, i32
  }
  func.func @transform_7(%arg0: i32) -> (i32, i32) {
    %c0_i32 = arith.constant 0 : i32
    %c0_i32_0 = arith.constant 0 : i32
    %c0_i32_1 = arith.constant 0 : i32
    return %c0_i32, %c0_i32_0 : i32, i32
  }
  func.func @transform_8(%arg0: i32) -> (i32, i32) {
    %c0_i32 = arith.constant 0 : i32
    %c0_i32_0 = arith.constant 0 : i32
    %c0_i32_1 = arith.constant 0 : i32
    return %c0_i32, %c0_i32_0 : i32, i32
  }
  func.func @transform_9(%arg0: i32) -> (i32, i32, i32) {
    %c0_i32 = arith.constant 0 : i32
    %c0_i32_0 = arith.constant 0 : i32
    %c0_i32_1 = arith.constant 0 : i32
    return %arg0, %c0_i32, %c0_i32_0 : i32, i32, i32
  }
}

module attributes {stable_mosaic.version = 11 : i64} {
  func.func @mlp_head_kernel(%arg0: i32, %arg1: memref<2x1920xbf16, #tpu.memory_space<vmem>>, %arg2: memref<1920x128xbf16, #tpu.memory_space<vmem>>, %arg3: memref<1x128xf32, #tpu.memory_space<vmem>>, %arg4: memref<128x128xbf16, #tpu.memory_space<vmem>>, %arg5: memref<1x128xf32, #tpu.memory_space<vmem>>, %arg6: memref<2x128xf32, #tpu.memory_space<vmem>>) attributes {dimension_semantics = [#tpu.dimension_semantics<arbitrary>], iteration_bounds = array<i64: 1>, scalar_prefetch = 0 : i64, scratch_operands = 0 : i64, tpu.core_type = #tpu.core_type<tc>, window_params = [{pipeline_mode = #tpu.pipeline_mode<synchronous>, transform_indices = @transform_0, window_bounds = array<i64: 2, 1920>}, {pipeline_mode = #tpu.pipeline_mode<synchronous>, transform_indices = @transform_1, window_bounds = array<i64: 1920, 128>}, {pipeline_mode = #tpu.pipeline_mode<synchronous>, transform_indices = @transform_2, window_bounds = array<i64: 1, 128>}, {pipeline_mode = #tpu.pipeline_mode<synchronous>, transform_indices = @transform_3, window_bounds = array<i64: 128, 128>}, {pipeline_mode = #tpu.pipeline_mode<synchronous>, transform_indices = @transform_4, window_bounds = array<i64: 1, 128>}, {pipeline_mode = #tpu.pipeline_mode<synchronous>, transform_indices = @transform_5, window_bounds = array<i64: 2, 128>}]} {
    %c0 = arith.constant 0 : index
    %c0_0 = arith.constant 0 : index
    %0 = vector.load %arg1[%c0, %c0_0] : memref<2x1920xbf16, #tpu.memory_space<vmem>>, vector<2x1920xbf16>
    %c0_1 = arith.constant 0 : index
    %c0_2 = arith.constant 0 : index
    %1 = vector.load %arg2[%c0_1, %c0_2] : memref<1920x128xbf16, #tpu.memory_space<vmem>>, vector<1920x128xbf16>
    %cst = arith.constant dense<0.000000e+00> : vector<2x128xf32>
    %2 = tpu.matmul %0, %1, %cst {dimension_numbers = #tpu.dot_dimension_numbers<[1], [0], [0], [1], [0, 0, 1, 1], [], []>} : vector<2x1920xbf16>, vector<1920x128xbf16>, vector<2x128xf32> -> vector<2x128xf32>
    %c0_3 = arith.constant 0 : index
    %c0_4 = arith.constant 0 : index
    %3 = vector.load %arg3[%c0_3, %c0_4] : memref<1x128xf32, #tpu.memory_space<vmem>>, vector<1x128xf32>
    %4 = vector.broadcast %3 : vector<1x128xf32> to vector<2x128xf32>
    %5 = arith.addf %2, %4 : vector<2x128xf32>
    %6 = arith.truncf %5 : vector<2x128xf32> to vector<2x128xbf16>
    %c0_5 = arith.constant 0 : index
    %c0_6 = arith.constant 0 : index
    %7 = vector.load %arg4[%c0_5, %c0_6] : memref<128x128xbf16, #tpu.memory_space<vmem>>, vector<128x128xbf16>
    %cst_7 = arith.constant dense<0.000000e+00> : vector<2x128xf32>
    %8 = tpu.matmul %6, %7, %cst_7 {dimension_numbers = #tpu.dot_dimension_numbers<[1], [0], [0], [1], [0, 0, 1, 1], [], []>} : vector<2x128xbf16>, vector<128x128xbf16>, vector<2x128xf32> -> vector<2x128xf32>
    %c0_8 = arith.constant 0 : index
    %c0_9 = arith.constant 0 : index
    %9 = vector.load %arg5[%c0_8, %c0_9] : memref<1x128xf32, #tpu.memory_space<vmem>>, vector<1x128xf32>
    %10 = vector.broadcast %9 : vector<1x128xf32> to vector<2x128xf32>
    %11 = arith.addf %8, %10 : vector<2x128xf32>
    %c0_10 = arith.constant 0 : index
    %c0_11 = arith.constant 0 : index
    %12 = vector.load %arg6[%c0_10, %c0_11] : memref<2x128xf32, #tpu.memory_space<vmem>>, vector<2x128xf32>
    tpu.vector_store %arg6[%c0_10, %c0_11], %11 {strides = array<i32>} : memref<2x128xf32, #tpu.memory_space<vmem>>, vector<2x128xf32>,
    return
  }
  func.func @transform_0(%arg0: i32) -> (i32, i32) {
    %c0_i32 = arith.constant 0 : i32
    %c0_i32_0 = arith.constant 0 : i32
    %c0_i32_1 = arith.constant 0 : i32
    return %c0_i32, %c0_i32_0 : i32, i32
  }
  func.func @transform_1(%arg0: i32) -> (i32, i32) {
    %c0_i32 = arith.constant 0 : i32
    %c0_i32_0 = arith.constant 0 : i32
    %c0_i32_1 = arith.constant 0 : i32
    return %c0_i32, %c0_i32_0 : i32, i32
  }
  func.func @transform_2(%arg0: i32) -> (i32, i32) {
    %c0_i32 = arith.constant 0 : i32
    %c0_i32_0 = arith.constant 0 : i32
    %c0_i32_1 = arith.constant 0 : i32
    return %c0_i32, %c0_i32_0 : i32, i32
  }
  func.func @transform_3(%arg0: i32) -> (i32, i32) {
    %c0_i32 = arith.constant 0 : i32
    %c0_i32_0 = arith.constant 0 : i32
    %c0_i32_1 = arith.constant 0 : i32
    return %c0_i32, %c0_i32_0 : i32, i32
  }
  func.func @transform_4(%arg0: i32) -> (i32, i32) {
    %c0_i32 = arith.constant 0 : i32
    %c0_i32_0 = arith.constant 0 : i32
    %c0_i32_1 = arith.constant 0 : i32
    return %c0_i32, %c0_i32_0 : i32, i32
  }
  func.func @transform_5(%arg0: i32) -> (i32, i32) {
    %c0_i32 = arith.constant 0 : i32
    %c0_i32_0 = arith.constant 0 : i32
    %c0_i32_1 = arith.constant 0 : i32
    return %c0_i32, %c0_i32_0 : i32, i32
  }
}

</mosaic_0001>

<llo_original>
// kernel: _lambda_.2
$region0: #{_lambda_.2}
  #allocation0 [shape = 'u32[]', space=smem, size = 0x4, offset = 0x4, fixed_abs, tag = 'smem constant byte address 0x4 - core index']
  #allocation1 [shape = 'u32[144,128]{1,0:T(1,128)}', space=vmem, size = 0x12000, scoped, tag = 'internal scratch']
  %s0 = inlined_call_operand.vmem [shape: bf16[2,115,128], index: 0, kind: input, shape index: {}]
  %s1 = inlined_call_operand.hbm [shape: bf16[128,128], index: 1, kind: input, shape index: {}]
  %s2 = inlined_call_operand.hbm [shape: f32[1,128], index: 2, kind: input, shape index: {}]
  %s3 = inlined_call_operand.hbm [shape: f32[1,128], index: 3, kind: input, shape index: {}]
  %s4 = inlined_call_operand.hbm [shape: f32[1,128], index: 4, kind: input, shape index: {}]
  %s5 = inlined_call_operand.hbm [shape: bf16[128,128], index: 5, kind: input, shape index: {}]
  %s6 = inlined_call_operand.hbm [shape: f32[1,128], index: 6, kind: input, shape index: {}]
  %s7 = inlined_call_operand.hbm [shape: f32[1,128], index: 7, kind: input, shape index: {}]
  %s8 = inlined_call_operand.hbm [shape: f32[1,128], index: 8, kind: input, shape index: {}]
  %s9 = inlined_call_operand.vmem [shape: bf16[2,113,16], index: 9, kind: output, shape index: {}]
  %s10 = sld [smem:[#allocation0]]
  $region101: #{_lambda_.2} parent=0
    _
  %s12 = ssub.s32 1, %s10
  %s13 = scalar_select 0, %s12, %s10
  $region1: #{_lambda_.2} parent=0
    #allocation2 [shape = 'u8[32768]{0}', space=vmem, size = 0x8000, scoped, tag = 'input window, operand 1, single buffered']
    #allocation3 [shape = 's32[2]{0}', space=sflag, size = 0x8, scoped, tag = 'scoped memory for _lambda_.2']
    #allocation4 [shape = 'u8[512]{0}', space=vmem, size = 0x400, scoped, tag = 'input window, operand 2, single buffered']
    #allocation5 [shape = 's32[1]{0}', space=sflag, size = 0x4, scoped, tag = 'scoped memory for _lambda_.2']
    #allocation6 [shape = 'u8[512]{0}', space=vmem, size = 0x400, scoped, tag = 'input window, operand 3, single buffered']
    #allocation7 [shape = 'u8[512]{0}', space=vmem, size = 0x400, scoped, tag = 'input window, operand 4, single buffered']
    #allocation8 [shape = 's32[1]{0}', space=sflag, size = 0x4, scoped, tag = 'scoped memory for _lambda_.2']
    #allocation9 [shape = 'u8[32768]{0}', space=vmem, size = 0x8000, scoped, tag = 'input window, operand 5, single buffered']
    #allocation10 [shape = 'u8[512]{0}', space=vmem, size = 0x400, scoped, tag = 'input window, operand 6, single buffered']
    #allocation11 [shape = 's32[1]{0}', space=sflag, size = 0x4, scoped, tag = 'scoped memory for _lambda_.2']
    #allocation12 [shape = 'u8[512]{0}', space=vmem, size = 0x400, scoped, tag = 'input window, operand 7, single buffered']
    #allocation13 [shape = 'u8[512]{0}', space=vmem, size = 0x400, scoped, tag = 'input window, operand 8, single buffered']
    #allocation14 [shape = 's32[1]{0}', space=sflag, size = 0x4, scoped, tag = 'scoped memory for _lambda_.2']
    %14 = vsyncpa [#allocation3], 0
    %15 = vsyncpa [#allocation5], 0
    %16 = vsyncpa [#allocation8], 0
    %17 = vsyncpa [#allocation11], 0
    %18 = vsyncpa [#allocation14], 0
    loop: start=0, step=1, limit=4
    $region2: #{_lambda_.2} parent=1 // loop_pre_header
      _
    $region3: #{_lambda_.2} parent=1 // loop_header
      %s20 = sphi 0, %s24
      %p21 = scmp.ge.s32.totalorder %s20, 4
      %s30 = sphi 0, %s32
      %s33 = sphi 0, %s30
      %s34 = sphi 0, %s33
      %s50 = sphi 0, %s34
      %s54 = sphi 0, %s54
      %s56 = sphi 0, %s54
      %s57 = sphi 0, %s56
      %s71 = sphi 0, %s57
      %s75 = sphi 0, %s75
      %s77 = sphi 0, %s75
      %s78 = sphi 0, %s77
      %s92 = sphi 0, %s78
      %s96 = sphi 0, %s96
      %s98 = sphi 0, %s96
      %s99 = sphi 0, %s98
      %s113 = sphi 0, %s99
      %s117 = sphi 0, %s117
      %s119 = sphi 0, %s117
      %s120 = sphi 0, %s119
      %s134 = sphi 0, %s120
      %s138 = sphi 0, %s138
      %s140 = sphi 0, %s138
      %s141 = sphi 0, %s140
      %s155 = sphi 0, %s141
      %s159 = sphi 0, %s159
      %s161 = sphi 0, %s159
      %s162 = sphi 0, %s161
      %s176 = sphi 0, %s162
      %s180 = sphi 0, %s180
      %s182 = sphi 0, %s180
      %s183 = sphi 0, %s182
      %s197 = sphi 0, %s183
      %s201 = sphi 0, %s201
      %s203 = sphi 0, %s201
      %s204 = sphi 0, %s203
      %s218 = sphi 0, %s204
      %s224 = sphi 0, %s226
      %s227 = sphi 0, %s224
      %s228 = sphi 0, %s227
      %s244 = sphi 0, %s228
    $region4: #{_lambda_.2} parent=1 // loop_header_branch
      %23 = sbr.rel (%p21) target = $region8
    $region5: #{_lambda_.2} parent=1 // loop_body
      %s25 = ssub.s32 %s20, 1
      %s26 = ssub.s32 %s20, 2
      %s27 = sadd.s32 %s20, 1
      %s28 = ssub.s32 %s20, %s27
      %p29 = scmp.eq.s32.totalorder %s28, 0
      %s31 = sadd.s32 %s30, 1
      %s32 = scalar_select %p29, %s30, %s31
      %p35 = pneg %p29
      %p36 = scmp.eq.s32.totalorder %s20, 1
      %p37 = por %p35, %p36
      %p38 = scmp.ne.s32.totalorder %s30, %s33
      %p39 = scmp.eq.s32.totalorder %s20, 0
      %p40 = por %p38, %p39
      %p41 = scmp.ne.s32.totalorder %s30, %s33
      %p42 = scmp.eq.s32.totalorder %s25, 1
      %p43 = por %p41, %p42
      %p44 = scmp.ne.s32.totalorder %s33, %s34
      %p45 = scmp.eq.s32.totalorder %s25, 0
      %p46 = por %p44, %p45
      %p47 = scmp.ne.s32.totalorder %s33, %s34
      %p48 = scmp.eq.s32.totalorder %s26, 1
      %p49 = por %p47, %p48
      %p51 = scmp.ne.s32.totalorder %s34, %s50
      %p52 = scmp.eq.s32.totalorder %s26, 0
      %p53 = por %p51, %p52
      %s55 = sadd.s32 %s54, 1
      %p58 = scmp.eq.s32.totalorder %s20, 1
      %p59 = scmp.ne.s32.totalorder %s54, %s56
      %p60 = scmp.eq.s32.totalorder %s20, 0
      %p61 = por %p59, %p60
      %p62 = scmp.ne.s32.totalorder %s54, %s56
      %p63 = scmp.eq.s32.totalorder %s25, 1
      %p64 = por %p62, %p63
      %p65 = scmp.ne.s32.totalorder %s56, %s57
      %p66 = scmp.eq.s32.totalorder %s25, 0
      %p67 = por %p65, %p66
      %p68 = scmp.ne.s32.totalorder %s56, %s57
      %p69 = scmp.eq.s32.totalorder %s26, 1
      %p70 = por %p68, %p69
      %p72 = scmp.ne.s32.totalorder %s57, %s71
      %p73 = scmp.eq.s32.totalorder %s26, 0
      %p74 = por %p72, %p73
      %s76 = sadd.s32 %s75, 1
      %p79 = scmp.eq.s32.totalorder %s20, 1
      %p80 = scmp.ne.s32.totalorder %s75, %s77
      %p81 = scmp.eq.s32.totalorder %s20, 0
      %p82 = por %p80, %p81
      %p83 = scmp.ne.s32.totalorder %s75, %s77
      %p84 = scmp.eq.s32.totalorder %s25, 1
      %p85 = por %p83, %p84
      %p86 = scmp.ne.s32.totalorder %s77, %s78
      %p87 = scmp.eq.s32.totalorder %s25, 0
      %p88 = por %p86, %p87
      %p89 = scmp.ne.s32.totalorder %s77, %s78
      %p90 = scmp.eq.s32.totalorder %s26, 1
      %p91 = por %p89, %p90
      %p93 = scmp.ne.s32.totalorder %s78, %s92
      %p94 = scmp.eq.s32.totalorder %s26, 0
      %p95 = por %p93, %p94
      %s97 = sadd.s32 %s96, 1
      %p100 = scmp.eq.s32.totalorder %s20, 1
      %p101 = scmp.ne.s32.totalorder %s96, %s98
      %p102 = scmp.eq.s32.totalorder %s20, 0
      %p103 = por %p101, %p102
      %p104 = scmp.ne.s32.totalorder %s96, %s98
      %p105 = scmp.eq.s32.totalorder %s25, 1
      %p106 = por %p104, %p105
      %p107 = scmp.ne.s32.totalorder %s98, %s99
      %p108 = scmp.eq.s32.totalorder %s25, 0
      %p109 = por %p107, %p108
      %p110 = scmp.ne.s32.totalorder %s98, %s99
      %p111 = scmp.eq.s32.totalorder %s26, 1
      %p112 = por %p110, %p111
      %p114 = scmp.ne.s32.totalorder %s99, %s113
      %p115 = scmp.eq.s32.totalorder %s26, 0
      %p116 = por %p114, %p115
      %s118 = sadd.s32 %s117, 1
      %p121 = scmp.eq.s32.totalorder %s20, 1
      %p122 = scmp.ne.s32.totalorder %s117, %s119
      %p123 = scmp.eq.s32.totalorder %s20, 0
      %p124 = por %p122, %p123
      %p125 = scmp.ne.s32.totalorder %s117, %s119
      %p126 = scmp.eq.s32.totalorder %s25, 1
      %p127 = por %p125, %p126
      %p128 = scmp.ne.s32.totalorder %s119, %s120
      %p129 = scmp.eq.s32.totalorder %s25, 0
      %p130 = por %p128, %p129
      %p131 = scmp.ne.s32.totalorder %s119, %s120
      %p132 = scmp.eq.s32.totalorder %s26, 1
      %p133 = por %p131, %p132
      %p135 = scmp.ne.s32.totalorder %s120, %s134
      %p136 = scmp.eq.s32.totalorder %s26, 0
      %p137 = por %p135, %p136
      %s139 = sadd.s32 %s138, 1
      %p142 = scmp.eq.s32.totalorder %s20, 1
      %p143 = scmp.ne.s32.totalorder %s138, %s140
      %p144 = scmp.eq.s32.totalorder %s20, 0
      %p145 = por %p143, %p144
      %p146 = scmp.ne.s32.totalorder %s138, %s140
      %p147 = scmp.eq.s32.totalorder %s25, 1
      %p148 = por %p146, %p147
      %p149 = scmp.ne.s32.totalorder %s140, %s141
      %p150 = scmp.eq.s32.totalorder %s25, 0
      %p151 = por %p149, %p150
      %p152 = scmp.ne.s32.totalorder %s140, %s141
      %p153 = scmp.eq.s32.totalorder %s26, 1
      %p154 = por %p152, %p153
      %p156 = scmp.ne.s32.totalorder %s141, %s155
      %p157 = scmp.eq.s32.totalorder %s26, 0
      %p158 = por %p156, %p157
      %s160 = sadd.s32 %s159, 1
      %p163 = scmp.eq.s32.totalorder %s20, 1
      %p164 = scmp.ne.s32.totalorder %s159, %s161
      %p165 = scmp.eq.s32.totalorder %s20, 0
      %p166 = por %p164, %p165
      %p167 = scmp.ne.s32.totalorder %s159, %s161
      %p168 = scmp.eq.s32.totalorder %s25, 1
      %p169 = por %p167, %p168
      %p170 = scmp.ne.s32.totalorder %s161, %s162
      %p171 = scmp.eq.s32.totalorder %s25, 0
      %p172 = por %p170, %p171
      %p173 = scmp.ne.s32.totalorder %s161, %s162
      %p174 = scmp.eq.s32.totalorder %s26, 1
      %p175 = por %p173, %p174
      %p177 = scmp.ne.s32.totalorder %s162, %s176
      %p178 = scmp.eq.s32.totalorder %s26, 0
      %p179 = por %p177, %p178
      %s181 = sadd.s32 %s180, 1
      %p184 = scmp.eq.s32.totalorder %s20, 1
      %p185 = scmp.ne.s32.totalorder %s180, %s182
      %p186 = scmp.eq.s32.totalorder %s20, 0
      %p187 = por %p185, %p186
      %p188 = scmp.ne.s32.totalorder %s180, %s182
      %p189 = scmp.eq.s32.totalorder %s25, 1
      %p190 = por %p188, %p189
      %p191 = scmp.ne.s32.totalorder %s182, %s183
      %p192 = scmp.eq.s32.totalorder %s25, 0
      %p193 = por %p191, %p192
      %p194 = scmp.ne.s32.totalorder %s182, %s183
      %p195 = scmp.eq.s32.totalorder %s26, 1
      %p196 = por %p194, %p195
      %p198 = scmp.ne.s32.totalorder %s183, %s197
      %p199 = scmp.eq.s32.totalorder %s26, 0
      %p200 = por %p198, %p199
      %s202 = sadd.s32 %s201, 1
      %p205 = scmp.eq.s32.totalorder %s20, 1
      %p206 = scmp.ne.s32.totalorder %s201, %s203
      %p207 = scmp.eq.s32.totalorder %s20, 0
      %p208 = por %p206, %p207
      %p209 = scmp.ne.s32.totalorder %s201, %s203
      %p210 = scmp.eq.s32.totalorder %s25, 1
      %p211 = por %p209, %p210
      %p212 = scmp.ne.s32.totalorder %s203, %s204
      %p213 = scmp.eq.s32.totalorder %s25, 0
      %p214 = por %p212, %p213
      %p215 = scmp.ne.s32.totalorder %s203, %s204
      %p216 = scmp.eq.s32.totalorder %s26, 1
      %p217 = por %p215, %p216
      %p219 = scmp.ne.s32.totalorder %s204, %s218
      %p220 = scmp.eq.s32.totalorder %s26, 0
      %p221 = por %p219, %p220
      %s222 = ssub.s32 %s20, %s27
      %p223 = scmp.eq.s32.totalorder %s222, 0
      %s225 = sadd.s32 %s224, 1
      %s226 = scalar_select %p223, %s224, %s225
      %p229 = pneg %p223
      %p230 = scmp.eq.s32.totalorder %s20, 1
      %p231 = por %p229, %p230
      %p232 = scmp.ne.s32.totalorder %s224, %s227
      %p233 = scmp.eq.s32.totalorder %s20, 0
      %p234 = por %p232, %p233
      %p235 = scmp.ne.s32.totalorder %s224, %s227
      %p236 = scmp.eq.s32.totalorder %s25, 1
      %p237 = por %p235, %p236
      %p238 = scmp.ne.s32.totalorder %s227, %s228
      %p239 = scmp.eq.s32.totalorder %s25, 0
      %p240 = por %p238, %p239
      %p241 = scmp.ne.s32.totalorder %s227, %s228
      %p242 = scmp.eq.s32.totalorder %s26, 1
      %p243 = por %p241, %p242
      %p245 = scmp.ne.s32.totalorder %s228, %s244
      %p246 = scmp.eq.s32.totalorder %s26, 0
      %p247 = por %p245, %p246
      %p248 = scmp.le.s32.totalorder 1, %s20
      %p249 = scmp.lt.s32.totalorder %s20, 3
      %p250 = pnand %p248, %p249
      %p251 = pneg %p250
      // Predicated region
      $region9: #{_lambda_.2} parent=5 // pred_check
        _
      $region10: #{_lambda_.2} parent=5 // pred_check_branch
        %253 = sbr.rel (%p250) target = $region12
      $region11: #{_lambda_.2} parent=5 // pred_region
        %s254 = ssub.s32 %s20, 1
        // Predicated region
        $region13: #{_lambda_.2} parent=11 // pred_check
          %p255 = pneg %p67
        $region14: #{_lambda_.2} parent=11 // pred_check_branch
          %257 = sbr.rel (%p255) target = $region16
        $region15: #{_lambda_.2} parent=11 // pred_region
          %s259 = ssub.s32 1024, 1024
          %260 = vsyncadd [#allocation3], %s259
          %s261 = sshll.u32 [#allocation2], 4
          %s262 = int_to_ptr.vmem [resolvable:$true] %s261
          %267 = dma.hbm_to_vmem [thread:$0]  %s1, 1024, %s262, [#allocation3], 64, 64, 4
        $region16: #{_lambda_.2} parent=11 // pred_fallthru
          _
        // Predicated region
        $region17: #{_lambda_.2} parent=11 // pred_check
          %p268 = pneg %p88
        $region18: #{_lambda_.2} parent=11 // pred_check_branch
          %270 = sbr.rel (%p268) target = $region20
        $region19: #{_lambda_.2} parent=11 // pred_region
          %s272 = ssub.s32 16, 16
          %273 = vsyncadd [#allocation5], %s272
          %s275 = sshll.u32 [#allocation4], 4
          %s276 = int_to_ptr.vmem [resolvable:$true] %s275
          %278 = dma.hbm_to_vmem [thread:$0]  %s2, 16, %s276, [#allocation5]
        $region20: #{_lambda_.2} parent=11 // pred_fallthru
          _
        // Predicated region
        $region21: #{_lambda_.2} parent=11 // pred_check
          %p279 = pneg %p109
        $region22: #{_lambda_.2} parent=11 // pred_check_branch
          %281 = sbr.rel (%p279) target = $region24
        $region23: #{_lambda_.2} parent=11 // pred_region
          %s283 = ssub.s32 16, 16
          %284 = vsyncadd [#allocation5], %s283
          %s286 = sshll.u32 [#allocation6], 4
          %s287 = int_to_ptr.vmem [resolvable:$true] %s286
          %289 = dma.hbm_to_vmem [thread:$0]  %s3, 16, %s287, [#allocation5]
        $region24: #{_lambda_.2} parent=11 // pred_fallthru
          _
        // Predicated region
        $region25: #{_lambda_.2} parent=11 // pred_check
          %p290 = pneg %p130
        $region26: #{_lambda_.2} parent=11 // pred_check_branch
          %292 = sbr.rel (%p290) target = $region28
        $region27: #{_lambda_.2} parent=11 // pred_region
          %s294 = ssub.s32 16, 16
          %295 = vsyncadd [#allocation8], %s294
          %s297 = sshll.u32 [#allocation7], 4
          %s298 = int_to_ptr.vmem [resolvable:$true] %s297
          %300 = dma.hbm_to_vmem [thread:$0]  %s4, 16, %s298, [#allocation8]
        $region28: #{_lambda_.2} parent=11 // pred_fallthru
          _
        // Predicated region
        $region29: #{_lambda_.2} parent=11 // pred_check
          %p301 = pneg %p151
        $region30: #{_lambda_.2} parent=11 // pred_check_branch
          %303 = sbr.rel (%p301) target = $region32
        $region31: #{_lambda_.2} parent=11 // pred_region
          %s305 = ssub.s32 1024, 1024
          %306 = vsyncadd [#allocation8], %s305
          %s307 = sshll.u32 [#allocation9], 4
          %s308 = int_to_ptr.vmem [resolvable:$true] %s307
          %313 = dma.hbm_to_vmem [thread:$0]  %s5, 1024, %s308, [#allocation8], 64, 64, 4
        $region32: #{_lambda_.2} parent=11 // pred_fallthru
          _
        // Predicated region
        $region33: #{_lambda_.2} parent=11 // pred_check
          %p314 = pneg %p172
        $region34: #{_lambda_.2} parent=11 // pred_check_branch
          %316 = sbr.rel (%p314) target = $region36
        $region35: #{_lambda_.2} parent=11 // pred_region
          %s318 = ssub.s32 16, 16
          %319 = vsyncadd [#allocation11], %s318
          %s321 = sshll.u32 [#allocation10], 4
          %s322 = int_to_ptr.vmem [resolvable:$true] %s321
          %324 = dma.hbm_to_vmem [thread:$0]  %s6, 16, %s322, [#allocation11]
        $region36: #{_lambda_.2} parent=11 // pred_fallthru
          _
        // Predicated region
        $region37: #{_lambda_.2} parent=11 // pred_check
          %p325 = pneg %p193
        $region38: #{_lambda_.2} parent=11 // pred_check_branch
          %327 = sbr.rel (%p325) target = $region40
        $region39: #{_lambda_.2} parent=11 // pred_region
          %s329 = ssub.s32 16, 16
          %330 = vsyncadd [#allocation11], %s329
          %s332 = sshll.u32 [#allocation12], 4
          %s333 = int_to_ptr.vmem [resolvable:$true] %s332
          %335 = dma.hbm_to_vmem [thread:$0]  %s7, 16, %s333, [#allocation11]
        $region40: #{_lambda_.2} parent=11 // pred_fallthru
          _
        // Predicated region
        $region41: #{_lambda_.2} parent=11 // pred_check
          %p336 = pneg %p214
        $region42: #{_lambda_.2} parent=11 // pred_check_branch
          %338 = sbr.rel (%p336) target = $region44
        $region43: #{_lambda_.2} parent=11 // pred_region
          %s340 = ssub.s32 16, 16
          %341 = vsyncadd [#allocation14], %s340
          %s343 = sshll.u32 [#allocation13], 4
          %s344 = int_to_ptr.vmem [resolvable:$true] %s343
          %346 = dma.hbm_to_vmem [thread:$0]  %s8, 16, %s344, [#allocation14]
        $region44: #{_lambda_.2} parent=11 // pred_fallthru
          _
      $region12: #{_lambda_.2} parent=5 // pred_fallthru
        _
      %p347 = scmp.lt.s32.totalorder %s20, 2
      // Predicated region
      $region45: #{_lambda_.2} parent=5 // pred_check
        %p348 = pneg %p347
      $region46: #{_lambda_.2} parent=5 // pred_check_branch
        %350 = sbr.rel (%p348) target = $region48
      $region47: #{_lambda_.2} parent=5 // pred_region
        // Predicated region
        $region49: #{_lambda_.2} parent=47 // pred_check
          %p351 = pneg %p40
        $region50: #{_lambda_.2} parent=47 // pred_check_branch
          %353 = sbr.rel (%p351) target = $region52
        $region51: #{_lambda_.2} parent=47 // pred_region
          %p354 = scmp.lt.s32.totalorder %s20, 1
          %s355 = scalar_select %p354, %s20, 1
          %s356 = smul.addr %s355, 15
          %s357 = smul.addr %s356, 4
          %s358 = scalar_lea.vmem %s0, %s357
        $region52: #{_lambda_.2} parent=47 // pred_fallthru
          _
      $region48: #{_lambda_.2} parent=5 // pred_fallthru
        _
      %p359 = scmp.le.s32.totalorder 1, %s20
      %p360 = scmp.lt.s32.totalorder %s20, 3
      %p361 = pnand %p359, %p360
      %p362 = pneg %p361
      // Predicated region
      $region53: #{_lambda_.2} parent=5 // pred_check
        _
      $region54: #{_lambda_.2} parent=5 // pred_check_branch
        %364 = sbr.rel (%p361) target = $region56
      $region55: #{_lambda_.2} parent=5 // pred_region
        %s365 = ssub.s32 %s20, 1
        // Predicated region
        $region57: #{_lambda_.2} parent=55 // pred_check
          %p366 = pneg %p67
        $region58: #{_lambda_.2} parent=55 // pred_check_branch
          %368 = sbr.rel (%p366) target = $region60
        $region59: #{_lambda_.2} parent=55 // pred_region
          %369 = dma.done [#allocation3], 1024
        $region60: #{_lambda_.2} parent=55 // pred_fallthru
          _
        // Predicated region
        $region61: #{_lambda_.2} parent=55 // pred_check
          %p370 = pneg %p88
        $region62: #{_lambda_.2} parent=55 // pred_check_branch
          %372 = sbr.rel (%p370) target = $region64
        $region63: #{_lambda_.2} parent=55 // pred_region
          %373 = dma.done [#allocation5], 16
        $region64: #{_lambda_.2} parent=55 // pred_fallthru
          _
        // Predicated region
        $region65: #{_lambda_.2} parent=55 // pred_check
          %p374 = pneg %p109
        $region66: #{_lambda_.2} parent=55 // pred_check_branch
          %376 = sbr.rel (%p374) target = $region68
        $region67: #{_lambda_.2} parent=55 // pred_region
          %377 = dma.done [#allocation5], 16
        $region68: #{_lambda_.2} parent=55 // pred_fallthru
          _
        // Predicated region
        $region69: #{_lambda_.2} parent=55 // pred_check
          %p378 = pneg %p130
        $region70: #{_lambda_.2} parent=55 // pred_check_branch
          %380 = sbr.rel (%p378) target = $region72
        $region71: #{_lambda_.2} parent=55 // pred_region
          %381 = dma.done [#allocation8], 16
        $region72: #{_lambda_.2} parent=55 // pred_fallthru
          _
        // Predicated region
        $region73: #{_lambda_.2} parent=55 // pred_check
          %p382 = pneg %p151
        $region74: #{_lambda_.2} parent=55 // pred_check_branch
          %384 = sbr.rel (%p382) target = $region76
        $region75: #{_lambda_.2} parent=55 // pred_region
          %385 = dma.done [#allocation8], 1024
        $region76: #{_lambda_.2} parent=55 // pred_fallthru
          _
        // Predicated region
        $region77: #{_lambda_.2} parent=55 // pred_check
          %p386 = pneg %p172
        $region78: #{_lambda_.2} parent=55 // pred_check_branch
          %388 = sbr.rel (%p386) target = $region80
        $region79: #{_lambda_.2} parent=55 // pred_region
          %389 = dma.done [#allocation11], 16
        $region80: #{_lambda_.2} parent=55 // pred_fallthru
          _
        // Predicated region
        $region81: #{_lambda_.2} parent=55 // pred_check
          %p390 = pneg %p193
        $region82: #{_lambda_.2} parent=55 // pred_check_branch
          %392 = sbr.rel (%p390) target = $region84
        $region83: #{_lambda_.2} parent=55 // pred_region
          %393 = dma.done [#allocation11], 16
        $region84: #{_lambda_.2} parent=55 // pred_fallthru
          _
        // Predicated region
        $region85: #{_lambda_.2} parent=55 // pred_check
          %p394 = pneg %p214
        $region86: #{_lambda_.2} parent=55 // pred_check_branch
          %396 = sbr.rel (%p394) target = $region88
        $region87: #{_lambda_.2} parent=55 // pred_region
          %397 = dma.done [#allocation14], 16
        $region88: #{_lambda_.2} parent=55 // pred_fallthru
          _
        %p398 = scmp.lt.s32.totalorder %s25, 1
        %s399 = scalar_select %p398, %s25, 1
        %s400 = smul.addr %s399, 15
        %s401 = smul.addr %s400, 4
        %s402 = scalar_lea.vmem %s0, %s401
        %p403 = pneg %p46
        %p404 = pneg %p43
        %p405 = pneg %p67
        %p406 = pneg %p64
        %p407 = pneg %p88
        %p408 = pneg %p85
        %p409 = pneg %p109
        %p410 = pneg %p106
        %p411 = pneg %p130
        %p412 = pneg %p127
        %p413 = pneg %p151
        %p414 = pneg %p148
        %p415 = pneg %p172
        %p416 = pneg %p169
        %p417 = pneg %p193
        %p418 = pneg %p190
        %p419 = pneg %p214
        %p420 = pneg %p211
        %p421 = pneg %p240
        %p422 = pneg %p237
        %p423 = scmp.lt.s32.totalorder %s25, 1
        %s424 = scalar_select %p423, %s25, 1
        %s425 = smul.addr %s424, 15
        %s426 = smul.addr %s425, 4
        %s427 = scalar_lea.vmem %s9, %s426
        %p428 = scmp.lt.s32.totalorder %s25, 1
        %s429 = scalar_select %p428, %s25, 1
        %s430 = smul.addr %s429, 15
        %s431 = smul.addr %s430, 4
        %s432 = scalar_lea.vmem %s0, %s431
        %p433 = scmp.lt.s32.totalorder %s25, 1
        %s434 = scalar_select %p433, %s25, 1
        %s435 = smul.addr %s434, 15
        %s436 = smul.addr %s435, 4
        %s437 = scalar_lea.vmem %s9, %s436
        %v441 = vld [vmem:[%s432] sm:$0xf]
        %v442 = vld [vmem:[%s432 + $0x4] sm:$0xf]
        %v443 = vld [vmem:[%s432 + $0x8] sm:$0xf]
        %v444 = vld [vmem:[%s432 + $0xc] sm:$0xf]
        %v445 = vld [vmem:[%s432 + $0x10] sm:$0xf]
        %v446 = vld [vmem:[%s432 + $0x14] sm:$0xf]
        %v447 = vld [vmem:[%s432 + $0x18] sm:$0xf]
        %v448 = vld [vmem:[%s432 + $0x1c] sm:$0xf]
        %v449 = vld [vmem:[%s432 + $0x20] sm:$0xf]
        %v450 = vld [vmem:[%s432 + $0x24] sm:$0xf]
        %v451 = vld [vmem:[%s432 + $0x28] sm:$0xf]
        %v452 = vld [vmem:[%s432 + $0x2c] sm:$0xf]
        %v453 = vld [vmem:[%s432 + $0x30] sm:$0xf]
        %v454 = vld [vmem:[%s432 + $0x34] sm:$0xf]
        %v455 = vld [vmem:[%s432 + $0x38] sm:$0x3]
        %v456 = vld [vmem:[#allocation2] sm:$0xf]
        %v457 = vld [vmem:[#allocation2 + $0x4] sm:$0xf]
        %v458 = vld [vmem:[#allocation2 + $0x8] sm:$0xf]
        %v459 = vld [vmem:[#allocation2 + $0xc] sm:$0xf]
        %v460 = vld [vmem:[#allocation2 + $0x10] sm:$0xf]
        %v461 = vld [vmem:[#allocation2 + $0x14] sm:$0xf]
        %v462 = vld [vmem:[#allocation2 + $0x18] sm:$0xf]
        %v463 = vld [vmem:[#allocation2 + $0x1c] sm:$0xf]
        %v464 = vld [vmem:[#allocation2 + $0x20] sm:$0xf]
        %v465 = vld [vmem:[#allocation2 + $0x24] sm:$0xf]
        %v466 = vld [vmem:[#allocation2 + $0x28] sm:$0xf]
        %v467 = vld [vmem:[#allocation2 + $0x2c] sm:$0xf]
        %v468 = vld [vmem:[#allocation2 + $0x30] sm:$0xf]
        %v469 = vld [vmem:[#allocation2 + $0x34] sm:$0xf]
        %v470 = vld [vmem:[#allocation2 + $0x38] sm:$0xf]
        %v471 = vld [vmem:[#allocation2 + $0x3c] sm:$0xf]
        %v472 = vld [vmem:[#allocation4] sm:$0x1]
        %v474 = vlaneseq
        %v475 = vshrl.u32 %v474, 7
        %v476 = vsub.s32 0, %v475
        %v477 = vrot.slane %v472, %v476
        %v494 = vunpack.c.l.b16 %v441
        %v495 = vunpack.c.l.b16 %v442
        %v496 = vunpack.c.l.b16 %v443
        %v497 = vunpack.c.l.b16 %v444
        %v498 = vunpack.c.l.b16 %v445
        %v499 = vunpack.c.l.b16 %v446
        %v500 = vunpack.c.l.b16 %v447
        %v501 = vunpack.c.l.b16 %v448
        %v502 = vunpack.c.l.b16 %v449
        %v503 = vunpack.c.l.b16 %v450
        %v504 = vunpack.c.l.b16 %v451
        %v505 = vunpack.c.l.b16 %v452
        %v506 = vunpack.c.l.b16 %v453
        %v507 = vunpack.c.l.b16 %v454
        %v508 = vunpack.c.l.b16 %v455
        %v509 = vpack.c.b16 %v495, %v494
        %v510 = vpack.c.b16 %v497, %v496
        %v511 = vpack.c.b16 %v499, %v498
        %v512 = vpack.c.b16 %v501, %v500
        %v513 = vpack.c.b16 %v503, %v502
        %v514 = vpack.c.b16 %v505, %v504
        %v515 = vpack.c.b16 %v507, %v506
        %v516 = vpack.c.b16 %v508, %v508
        %v541 = vunpack.c.l.b16 %v456
        %v542 = vunpack.c.l.b16 %v457
        %v543 = vunpack.c.l.b16 %v458
        %v544 = vunpack.c.l.b16 %v459
        %v545 = vunpack.c.l.b16 %v460
        %v546 = vunpack.c.l.b16 %v461
        %v547 = vunpack.c.l.b16 %v462
        %v548 = vunpack.c.l.b16 %v463
        %v549 = vunpack.c.l.b16 %v464
        %v550 = vunpack.c.l.b16 %v465
        %v551 = vunpack.c.l.b16 %v466
        %v552 = vunpack.c.l.b16 %v467
        %v553 = vunpack.c.l.b16 %v468
        %v554 = vunpack.c.l.b16 %v469
        %v555 = vunpack.c.l.b16 %v470
        %v556 = vunpack.c.l.b16 %v471
        %v557 = vpack.c.b16 %v542, %v541
        %v558 = vpack.c.b16 %v544, %v543
        %v559 = vpack.c.b16 %v546, %v545
        %v560 = vpack.c.b16 %v548, %v547
        %v561 = vpack.c.b16 %v550, %v549
        %v562 = vpack.c.b16 %v552, %v551
        %v563 = vpack.c.b16 %v554, %v553
        %v564 = vpack.c.b16 %v556, %v555
        %573 = vmatprep.subr.bf16.mxu0 0
        %574 = vmatpush1.bf16.msra.mxu0 %v557
        %575 = vmatprep.subr.bf16.mxu0 0
        %576 = vmatpush1.bf16.msra.mxu0 %v558
        %577 = vmatprep.subr.bf16.mxu0 0
        %578 = vmatpush1.bf16.msra.mxu0 %v559
        %579 = vmatprep.subr.bf16.mxu0 0
        %580 = vmatpush1.bf16.msra.mxu0 %v560
        %581 = vmatprep.subr.bf16.mxu0 0
        %582 = vmatpush1.bf16.msra.mxu0 %v561
        %583 = vmatprep.subr.bf16.mxu0 0
        %584 = vmatpush1.bf16.msra.mxu0 %v562
        %585 = vmatprep.subr.bf16.mxu0 0
        %586 = vmatpush1.bf16.msra.mxu0 %v563
        %587 = vmatprep.subr.bf16.mxu0 0
        %588 = vmatpush1.bf16.msra.mxu0 %v564
        %589 = vmatprep.subr.bf16.mxu0 0
        %590 = vmatpush1.bf16.msra.mxu0 0
        %591 = vmatprep.subr.bf16.mxu0 0
        %592 = vmatpush1.bf16.msra.mxu0 0
        %593 = vmatprep.subr.bf16.mxu0 0
        %594 = vmatpush1.bf16.msra.mxu0 0
        %595 = vmatprep.subr.bf16.mxu0 0
        %596 = vmatpush1.bf16.msra.mxu0 0
        %597 = vmatprep.subr.bf16.mxu0 0
        %598 = vmatpush1.bf16.msra.mxu0 0
        %599 = vmatprep.subr.bf16.mxu0 0
        %600 = vmatpush1.bf16.msra.mxu0 0
        %601 = vmatprep.subr.bf16.mxu0 0
        %602 = vmatpush1.bf16.msra.mxu0 0
        %603 = vmatprep.subr.bf16.mxu0 0
        %604 = vmatpush1.bf16.msra.mxu0 0
        %605 = vmatprep.mubr.bf16.mxu0 0
        %606 = vmatmul.mubr.bf16.gmra.mrb[0].mxu0 %v509
        %v607 = vpop.f32.mrb[0].mxu0
        %v608 = vadd.f32 %v477, %v607
        %v609 = vpop.f32.mrb[0].mxu0
        %v610 = vpop.f32.mrb[0].mxu0
        %v611 = vadd.f32 %v477, %v610
        %v612 = vpop.f32.mrb[0].mxu0
        %613 = vmatprep.mubr.bf16.mxu0 0
        %614 = vmatmul.mubr.bf16.gmra.mrb[0].mxu0 %v510
        %v615 = vpop.f32.mrb[0].mxu0
        %v616 = vadd.f32 %v477, %v615
        %v617 = vpop.f32.mrb[0].mxu0
        %v618 = vpop.f32.mrb[0].mxu0
        %v619 = vadd.f32 %v477, %v618
        %v620 = vpop.f32.mrb[0].mxu0
        %621 = vmatprep.mubr.bf16.mxu0 0
        %622 = vmatmul.mubr.bf16.gmra.mrb[0].mxu0 %v511
        %v623 = vpop.f32.mrb[0].mxu0
        %v624 = vadd.f32 %v477, %v623
        %v625 = vpop.f32.mrb[0].mxu0
        %v626 = vpop.f32.mrb[0].mxu0
        %v627 = vadd.f32 %v477, %v626
        %v628 = vpop.f32.mrb[0].mxu0
        %629 = vmatprep.mubr.bf16.mxu0 0
        %630 = vmatmul.mubr.bf16.gmra.mrb[0].mxu0 %v512
        %v631 = vpop.f32.mrb[0].mxu0
        %v632 = vadd.f32 %v477, %v631
        %v633 = vpop.f32.mrb[0].mxu0
        %v634 = vpop.f32.mrb[0].mxu0
        %v635 = vadd.f32 %v477, %v634
        %v636 = vpop.f32.mrb[0].mxu0
        %637 = vmatprep.mubr.bf16.mxu0 0
        %638 = vmatmul.mubr.bf16.gmra.mrb[0].mxu0 %v513
        %v639 = vpop.f32.mrb[0].mxu0
        %v640 = vadd.f32 %v477, %v639
        %v641 = vpop.f32.mrb[0].mxu0
        %v642 = vpop.f32.mrb[0].mxu0
        %v643 = vadd.f32 %v477, %v642
        %v644 = vpop.f32.mrb[0].mxu0
        %645 = vmatprep.mubr.bf16.mxu0 0
        %646 = vmatmul.mubr.bf16.gmra.mrb[0].mxu0 %v514
        %v647 = vpop.f32.mrb[0].mxu0
        %v648 = vadd.f32 %v477, %v647
        %v649 = vpop.f32.mrb[0].mxu0
        %v650 = vpop.f32.mrb[0].mxu0
        %v651 = vadd.f32 %v477, %v650
        %v652 = vpop.f32.mrb[0].mxu0
        %653 = vmatprep.mubr.bf16.mxu0 0
        %654 = vmatmul.mubr.bf16.gmra.mrb[0].mxu0 %v515
        %v655 = vpop.f32.mrb[0].mxu0
        %v656 = vadd.f32 %v477, %v655
        %v657 = vpop.f32.mrb[0].mxu0
        %v658 = vpop.f32.mrb[0].mxu0
        %v659 = vadd.f32 %v477, %v658
        %v660 = vpop.f32.mrb[0].mxu0
        %661 = vmatprep.mubr.bf16.mxu0 0
        %662 = vmatmul.mubr.bf16.gmra.mrb[0].mxu0 %v516
        %v663 = vpop.f32.mrb[0].mxu0
        %v664 = vadd.f32 %v477, %v663
        %v665 = vpop.f32.mrb[0].mxu0
        %v666 = vpop.f32.mrb[0].mxu0
        %v667 = vpop.f32.mrb[0].mxu0
        %668 = vdwg.mxu0
        %v669 = vmax.f32 %v608, 0.0
        %v670 = vmax.f32 %v611, 0.0
        %v671 = vmax.f32 %v616, 0.0
        %v672 = vmax.f32 %v619, 0.0
        %v673 = vmax.f32 %v624, 0.0
        %v674 = vmax.f32 %v627, 0.0
        %v675 = vmax.f32 %v632, 0.0
        %v676 = vmax.f32 %v635, 0.0
        %v677 = vmax.f32 %v640, 0.0
        %v678 = vmax.f32 %v643, 0.0
        %v679 = vmax.f32 %v648, 0.0
        %v680 = vmax.f32 %v651, 0.0
        %v681 = vmax.f32 %v656, 0.0
        %v682 = vmax.f32 %v659, 0.0
        %v683 = vmax.f32 %v664, 0.0
        %v684 = vld [vmem:[#allocation6] sm:$0x1]
        %v686 = vlaneseq
        %v687 = vshrl.u32 %v686, 7
        %v688 = vsub.s32 0, %v687
        %v689 = vrot.slane %v684, %v688
        %v691 = vmul.f32 %v669, %v689
        %v692 = vmul.f32 %v670, %v689
        %v693 = vmul.f32 %v671, %v689
        %v694 = vmul.f32 %v672, %v689
        %v695 = vmul.f32 %v673, %v689
        %v696 = vmul.f32 %v674, %v689
        %v697 = vmul.f32 %v675, %v689
        %v698 = vmul.f32 %v676, %v689
        %v699 = vmul.f32 %v677, %v689
        %v700 = vmul.f32 %v678, %v689
        %v701 = vmul.f32 %v679, %v689
        %v702 = vmul.f32 %v680, %v689
        %v703 = vmul.f32 %v681, %v689
        %v704 = vmul.f32 %v682, %v689
        %v705 = vmul.f32 %v683, %v689
        %v706 = vld [vmem:[#allocation7] sm:$0x1]
        %v708 = vlaneseq
        %v709 = vshrl.u32 %v708, 7
        %v710 = vsub.s32 0, %v709
        %v711 = vrot.slane %v706, %v710
        %v713 = vadd.f32 %v691, %v711
        %v714 = vadd.f32 %v692, %v711
        %v715 = vadd.f32 %v693, %v711
        %v716 = vadd.f32 %v694, %v711
        %v717 = vadd.f32 %v695, %v711
        %v718 = vadd.f32 %v696, %v711
        %v719 = vadd.f32 %v697, %v711
        %v720 = vadd.f32 %v698, %v711
        %v721 = vadd.f32 %v699, %v711
        %v722 = vadd.f32 %v700, %v711
        %v723 = vadd.f32 %v701, %v711
        %v724 = vadd.f32 %v702, %v711
        %v725 = vadd.f32 %v703, %v711
        %v726 = vadd.f32 %v704, %v711
        %v727 = vadd.f32 %v705, %v711
        %v728 = vpack.c.bf16 %v714, %v713
        %v729 = vpack.c.bf16 %v716, %v715
        %v730 = vpack.c.bf16 %v718, %v717
        %v731 = vpack.c.bf16 %v720, %v719
        %v732 = vpack.c.bf16 %v722, %v721
        %v733 = vpack.c.bf16 %v724, %v723
        %v734 = vpack.c.bf16 %v726, %v725
        %v735 = vpack.c.bf16 %v727, %v727
        %v736 = vlaneseq
        %v737 = vand.u32 %v736, 127
        %vm738 = vcmp.lt.s32.totalorder %v737, 8
        %vm739 = vcmp.lt.s32.totalorder %v737, 16
        %vm740 = vmpackc.low %vm739, %vm739
        %v741 = vsel %vm740, 65537, 0
        %v742 = vlaneseq
        %v743 = vshrl.u32 %v742, 7
        %v744 = vsub.s32 0, %v743
        %v745 = vrot.slane %v741, %v744
        %vm746 = vcmp.ne.s16.totalorder %v745, 0
        %vm747 = vsmask.f32 7424
        %v749 = vshrl.u32 %v728, 16
        %v751 = vshll.u32 %v728, 16
        %v753 = vrot.slane %v751, 1
        %v754 = vor.u32 %v749, %v753
        %v756 = vshll.u32 %v729, 16
        %v758 = vrot.slane %v756, 1
        %v759 = vsel %vm747, %v754, %v758
        %v760 = vshrl.u32 %v729, 16
        %v762 = vor.u32 %v760, %v758
        %v764 = vshll.u32 %v730, 16
        %v766 = vrot.slane %v764, 1
        %v767 = vsel %vm747, %v762, %v766
        %v768 = vshrl.u32 %v730, 16
        %v770 = vor.u32 %v768, %v766
        %v772 = vshll.u32 %v731, 16
        %v774 = vrot.slane %v772, 1
        %v775 = vsel %vm747, %v770, %v774
        %v776 = vshrl.u32 %v731, 16
        %v778 = vor.u32 %v776, %v774
        %v780 = vshll.u32 %v732, 16
        %v782 = vrot.slane %v780, 1
        %v783 = vsel %vm747, %v778, %v782
        %v784 = vshrl.u32 %v732, 16
        %v786 = vor.u32 %v784, %v782
        %v788 = vshll.u32 %v733, 16
        %v790 = vrot.slane %v788, 1
        %v791 = vsel %vm747, %v786, %v790
        %v792 = vshrl.u32 %v733, 16
        %v794 = vor.u32 %v792, %v790
        %v796 = vshll.u32 %v734, 16
        %v798 = vrot.slane %v796, 1
        %v799 = vsel %vm747, %v794, %v798
        %v800 = vshrl.u32 %v734, 16
        %v802 = vor.u32 %v800, %v798
        %v804 = vshll.u32 %v735, 16
        %v806 = vrot.slane %v804, 1
        %v807 = vsel %vm747, %v802, %v806
        %v808 = vshrl.u32 %v735, 16
        %v810 = vor.u32 %v808, %v806
        %v819 = vsel %vm746, %v728, %v759
        %v820 = vsel %vm746, %v729, %v767
        %v821 = vsel %vm746, %v730, %v775
        %v822 = vsel %vm746, %v731, %v783
        %v823 = vsel %vm746, %v732, %v791
        %v824 = vsel %vm746, %v733, %v799
        %v825 = vsel %vm746, %v734, %v807
        %v826 = vsel %vm746, %v735, %v810
        %vm827 = vmpackc.low %vm738, %vm738
        %v828 = vsel %vm827, 65537, 0
        %v829 = vlaneseq
        %v830 = vshrl.u32 %v829, 7
        %v831 = vsub.s32 0, %v830
        %v832 = vrot.slane %v828, %v831
        %vm833 = vcmp.ne.s16.totalorder %v832, 0
        %v835 = vshrl.u32 %v819, 16
        %v837 = vshll.u32 %v819, 16
        %v839 = vrot.slane %v837, 1
        %v840 = vor.u32 %v835, %v839
        %v842 = vshll.u32 %v820, 16
        %v844 = vrot.slane %v842, 1
        %v845 = vsel %vm747, %v840, %v844
        %v846 = vshrl.u32 %v820, 16
        %v848 = vor.u32 %v846, %v844
        %v850 = vshll.u32 %v821, 16
        %v852 = vrot.slane %v850, 1
        %v853 = vsel %vm747, %v848, %v852
        %v854 = vshrl.u32 %v821, 16
        %v856 = vor.u32 %v854, %v852
        %v858 = vshll.u32 %v822, 16
        %v860 = vrot.slane %v858, 1
        %v861 = vsel %vm747, %v856, %v860
        %v862 = vshrl.u32 %v822, 16
        %v864 = vor.u32 %v862, %v860
        %v866 = vshll.u32 %v823, 16
        %v868 = vrot.slane %v866, 1
        %v869 = vsel %vm747, %v864, %v868
        %v870 = vshrl.u32 %v823, 16
        %v872 = vor.u32 %v870, %v868
        %v874 = vshll.u32 %v824, 16
        %v876 = vrot.slane %v874, 1
        %v877 = vsel %vm747, %v872, %v876
        %v878 = vshrl.u32 %v824, 16
        %v880 = vor.u32 %v878, %v876
        %v882 = vshll.u32 %v825, 16
        %v884 = vrot.slane %v882, 1
        %v885 = vsel %vm747, %v880, %v884
        %v886 = vshrl.u32 %v825, 16
        %v888 = vor.u32 %v886, %v884
        %v890 = vshll.u32 %v826, 16
        %v892 = vrot.slane %v890, 1
        %v893 = vsel %vm747, %v888, %v892
        %v894 = vshrl.u32 %v826, 16
        %v904 = vsel %vm833, %v728, %v845
        %v905 = vsel %vm833, %v729, %v853
        %v906 = vsel %vm833, %v730, %v861
        %v907 = vsel %vm833, %v731, %v869
        %v908 = vsel %vm833, %v732, %v877
        %v909 = vsel %vm833, %v733, %v885
        %v910 = vsel %vm833, %v734, %v893
        %v911 = vsel %vm833, %v735, %v894
        %v912 = vld [vmem:[#allocation9] sm:$0xf]
        %v913 = vld [vmem:[#allocation9 + $0x4] sm:$0xf]
        %v914 = vld [vmem:[#allocation9 + $0x8] sm:$0xf]
        %v915 = vld [vmem:[#allocation9 + $0xc] sm:$0xf]
        %v916 = vld [vmem:[#allocation9 + $0x10] sm:$0xf]
        %v917 = vld [vmem:[#allocation9 + $0x14] sm:$0xf]
        %v918 = vld [vmem:[#allocation9 + $0x18] sm:$0xf]
        %v919 = vld [vmem:[#allocation9 + $0x1c] sm:$0xf]
        %v920 = vld [vmem:[#allocation9 + $0x20] sm:$0xf]
        %v921 = vld [vmem:[#allocation9 + $0x24] sm:$0xf]
        %v922 = vld [vmem:[#allocation9 + $0x28] sm:$0xf]
        %v923 = vld [vmem:[#allocation9 + $0x2c] sm:$0xf]
        %v924 = vld [vmem:[#allocation9 + $0x30] sm:$0xf]
        %v925 = vld [vmem:[#allocation9 + $0x34] sm:$0xf]
        %v926 = vld [vmem:[#allocation9 + $0x38] sm:$0xf]
        %v927 = vld [vmem:[#allocation9 + $0x3c] sm:$0xf]
        %v928 = vld [vmem:[#allocation10] sm:$0x1]
        %v930 = vlaneseq
        %v931 = vshrl.u32 %v930, 7
        %v932 = vsub.s32 0, %v931
        %v933 = vrot.slane %v928, %v932
        %v951 = vunpack.c.l.b16 %v912
        %v952 = vunpack.c.l.b16 %v913
        %v953 = vunpack.c.l.b16 %v914
        %v954 = vunpack.c.l.b16 %v915
        %v955 = vunpack.c.l.b16 %v916
        %v956 = vunpack.c.l.b16 %v917
        %v957 = vunpack.c.l.b16 %v918
        %v958 = vunpack.c.l.b16 %v919
        %v959 = vunpack.c.l.b16 %v920
        %v960 = vunpack.c.l.b16 %v921
        %v961 = vunpack.c.l.b16 %v922
        %v962 = vunpack.c.l.b16 %v923
        %v963 = vunpack.c.l.b16 %v924
        %v964 = vunpack.c.l.b16 %v925
        %v965 = vunpack.c.l.b16 %v926
        %v966 = vunpack.c.l.b16 %v927
        %v967 = vpack.c.b16 %v952, %v951
        %v968 = vpack.c.b16 %v954, %v953
        %v969 = vpack.c.b16 %v956, %v955
        %v970 = vpack.c.b16 %v958, %v957
        %v971 = vpack.c.b16 %v960, %v959
        %v972 = vpack.c.b16 %v962, %v961
        %v973 = vpack.c.b16 %v964, %v963
        %v974 = vpack.c.b16 %v966, %v965
        %983 = vmatprep.subr.bf16.mxu0 0
        %984 = vmatpush1.bf16.msra.mxu0 %v967
        %985 = vmatprep.subr.bf16.mxu0 0
        %986 = vmatpush1.bf16.msra.mxu0 %v968
        %987 = vmatprep.subr.bf16.mxu0 0
        %988 = vmatpush1.bf16.msra.mxu0 %v969
        %989 = vmatprep.subr.bf16.mxu0 0
        %990 = vmatpush1.bf16.msra.mxu0 %v970
        %991 = vmatprep.subr.bf16.mxu0 0
        %992 = vmatpush1.bf16.msra.mxu0 %v971
        %993 = vmatprep.subr.bf16.mxu0 0
        %994 = vmatpush1.bf16.msra.mxu0 %v972
        %995 = vmatprep.subr.bf16.mxu0 0
        %996 = vmatpush1.bf16.msra.mxu0 %v973
        %997 = vmatprep.subr.bf16.mxu0 0
        %998 = vmatpush1.bf16.msra.mxu0 %v974
        %999 = vmatprep.subr.bf16.mxu0 0
        %1000 = vmatpush1.bf16.msra.mxu0 0
        %1001 = vmatprep.subr.bf16.mxu0 0
        %1002 = vmatpush1.bf16.msra.mxu0 0
        %1003 = vmatprep.subr.bf16.mxu0 0
        %1004 = vmatpush1.bf16.msra.mxu0 0
        %1005 = vmatprep.subr.bf16.mxu0 0
        %1006 = vmatpush1.bf16.msra.mxu0 0
        %1007 = vmatprep.subr.bf16.mxu0 0
        %1008 = vmatpush1.bf16.msra.mxu0 0
        %1009 = vmatprep.subr.bf16.mxu0 0
        %1010 = vmatpush1.bf16.msra.mxu0 0
        %1011 = vmatprep.subr.bf16.mxu0 0
        %1012 = vmatpush1.bf16.msra.mxu0 0
        %1013 = vmatprep.subr.bf16.mxu0 0
        %1014 = vmatpush1.bf16.msra.mxu0 0
        %1015 = vmatprep.mubr.bf16.mxu0 0
        %1016 = vmatmul.mubr.bf16.gmra.mrb[0].mxu0 %v904
        %v1017 = vpop.f32.mrb[0].mxu0
        %v1018 = vadd.f32 %v933, %v1017
        %v1019 = vpop.f32.mrb[0].mxu0
        %v1020 = vpop.f32.mrb[0].mxu0
        %v1021 = vadd.f32 %v933, %v1020
        %v1022 = vpop.f32.mrb[0].mxu0
        %1023 = vmatprep.mubr.bf16.mxu0 0
        %1024 = vmatmul.mubr.bf16.gmra.mrb[0].mxu0 %v905
        %v1025 = vpop.f32.mrb[0].mxu0
        %v1026 = vadd.f32 %v933, %v1025
        %v1027 = vpop.f32.mrb[0].mxu0
        %v1028 = vpop.f32.mrb[0].mxu0
        %v1029 = vadd.f32 %v933, %v1028
        %v1030 = vpop.f32.mrb[0].mxu0
        %1031 = vmatprep.mubr.bf16.mxu0 0
        %1032 = vmatmul.mubr.bf16.gmra.mrb[0].mxu0 %v906
        %v1033 = vpop.f32.mrb[0].mxu0
        %v1034 = vadd.f32 %v933, %v1033
        %v1035 = vpop.f32.mrb[0].mxu0
        %v1036 = vpop.f32.mrb[0].mxu0
        %v1037 = vadd.f32 %v933, %v1036
        %v1038 = vpop.f32.mrb[0].mxu0
        %1039 = vmatprep.mubr.bf16.mxu0 0
        %1040 = vmatmul.mubr.bf16.gmra.mrb[0].mxu0 %v907
        %v1041 = vpop.f32.mrb[0].mxu0
        %v1042 = vadd.f32 %v933, %v1041
        %v1043 = vpop.f32.mrb[0].mxu0
        %v1044 = vpop.f32.mrb[0].mxu0
        %v1045 = vadd.f32 %v933, %v1044
        %v1046 = vpop.f32.mrb[0].mxu0
        %1047 = vmatprep.mubr.bf16.mxu0 0
        %1048 = vmatmul.mubr.bf16.gmra.mrb[0].mxu0 %v908
        %v1049 = vpop.f32.mrb[0].mxu0
        %v1050 = vadd.f32 %v933, %v1049
        %v1051 = vpop.f32.mrb[0].mxu0
        %v1052 = vpop.f32.mrb[0].mxu0
        %v1053 = vadd.f32 %v933, %v1052
        %v1054 = vpop.f32.mrb[0].mxu0
        %1055 = vmatprep.mubr.bf16.mxu0 0
        %1056 = vmatmul.mubr.bf16.gmra.mrb[0].mxu0 %v909
        %v1057 = vpop.f32.mrb[0].mxu0
        %v1058 = vadd.f32 %v933, %v1057
        %v1059 = vpop.f32.mrb[0].mxu0
        %v1060 = vpop.f32.mrb[0].mxu0
        %v1061 = vadd.f32 %v933, %v1060
        %v1062 = vpop.f32.mrb[0].mxu0
        %1063 = vmatprep.mubr.bf16.mxu0 0
        %1064 = vmatmul.mubr.bf16.gmra.mrb[0].mxu0 %v910
        %v1065 = vpop.f32.mrb[0].mxu0
        %v1066 = vadd.f32 %v933, %v1065
        %v1067 = vpop.f32.mrb[0].mxu0
        %v1068 = vpop.f32.mrb[0].mxu0
        %v1069 = vadd.f32 %v933, %v1068
        %v1070 = vpop.f32.mrb[0].mxu0
        %1071 = vmatprep.mubr.bf16.mxu0 0
        %1072 = vmatmul.mubr.bf16.gmra.mrb[0].mxu0 %v911
        %v1073 = vpop.f32.mrb[0].mxu0
        %v1074 = vadd.f32 %v933, %v1073
        %v1075 = vpop.f32.mrb[0].mxu0
        %v1076 = vpop.f32.mrb[0].mxu0
        %v1077 = vpop.f32.mrb[0].mxu0
        %1078 = vdwg.mxu0
        %v1079 = vmax.f32 %v1018, 0.0
        %v1080 = vmax.f32 %v1021, 0.0
        %v1081 = vmax.f32 %v1026, 0.0
        %v1082 = vmax.f32 %v1029, 0.0
        %v1083 = vmax.f32 %v1034, 0.0
        %v1084 = vmax.f32 %v1037, 0.0
        %v1085 = vmax.f32 %v1042, 0.0
        %v1086 = vmax.f32 %v1045, 0.0
        %v1087 = vmax.f32 %v1050, 0.0
        %v1088 = vmax.f32 %v1053, 0.0
        %v1089 = vmax.f32 %v1058, 0.0
        %v1090 = vmax.f32 %v1061, 0.0
        %v1091 = vmax.f32 %v1066, 0.0
        %v1092 = vmax.f32 %v1069, 0.0
        %v1093 = vmax.f32 %v1074, 0.0
        %v1094 = vld [vmem:[#allocation12] sm:$0x1]
        %v1096 = vlaneseq
        %v1097 = vshrl.u32 %v1096, 7
        %v1098 = vsub.s32 0, %v1097
        %v1099 = vrot.slane %v1094, %v1098
        %v1101 = vmul.f32 %v1079, %v1099
        %v1102 = vmul.f32 %v1080, %v1099
        %v1103 = vmul.f32 %v1081, %v1099
        %v1104 = vmul.f32 %v1082, %v1099
        %v1105 = vmul.f32 %v1083, %v1099
        %v1106 = vmul.f32 %v1084, %v1099
        %v1107 = vmul.f32 %v1085, %v1099
        %v1108 = vmul.f32 %v1086, %v1099
        %v1109 = vmul.f32 %v1087, %v1099
        %v1110 = vmul.f32 %v1088, %v1099
        %v1111 = vmul.f32 %v1089, %v1099
        %v1112 = vmul.f32 %v1090, %v1099
        %v1113 = vmul.f32 %v1091, %v1099
        %v1114 = vmul.f32 %v1092, %v1099
        %v1115 = vmul.f32 %v1093, %v1099
        %v1116 = vld [vmem:[#allocation13] sm:$0x1]
        %v1118 = vlaneseq
        %v1119 = vshrl.u32 %v1118, 7
        %v1120 = vsub.s32 0, %v1119
        %v1121 = vrot.slane %v1116, %v1120
        %v1123 = vadd.f32 %v1101, %v1121
        %v1124 = vadd.f32 %v1102, %v1121
        %v1125 = vadd.f32 %v1103, %v1121
        %v1126 = vadd.f32 %v1104, %v1121
        %v1127 = vadd.f32 %v1105, %v1121
        %v1128 = vadd.f32 %v1106, %v1121
        %v1129 = vadd.f32 %v1107, %v1121
        %v1130 = vadd.f32 %v1108, %v1121
        %v1131 = vadd.f32 %v1109, %v1121
        %v1132 = vadd.f32 %v1110, %v1121
        %v1133 = vadd.f32 %v1111, %v1121
        %v1134 = vadd.f32 %v1112, %v1121
        %v1135 = vadd.f32 %v1113, %v1121
        %v1136 = vadd.f32 %v1114, %v1121
        %v1137 = vadd.f32 %v1115, %v1121
        %v1138 = vpack.c.bf16 %v1124, %v1123
        %v1139 = vpack.c.bf16 %v1126, %v1125
        %v1140 = vpack.c.bf16 %v1128, %v1127
        %v1141 = vpack.c.bf16 %v1130, %v1129
        %v1142 = vpack.c.bf16 %v1132, %v1131
        %v1143 = vpack.c.bf16 %v1134, %v1133
        %v1144 = vpack.c.bf16 %v1136, %v1135
        %v1145 = vpack.c.bf16 %v1137, %v1137
        %v1154 = vunpack.c.l.b16 %v1138
        %v1155 = vunpack.c.h.b16 %v1138
        %v1156 = vunpack.c.l.b16 %v1139
        %v1157 = vunpack.c.h.b16 %v1139
        %v1158 = vunpack.c.l.b16 %v1140
        %v1159 = vunpack.c.h.b16 %v1140
        %v1160 = vunpack.c.l.b16 %v1141
        %v1161 = vunpack.c.h.b16 %v1141
        %v1162 = vunpack.c.l.b16 %v1142
        %v1163 = vunpack.c.h.b16 %v1142
        %v1164 = vunpack.c.l.b16 %v1143
        %v1165 = vunpack.c.h.b16 %v1143
        %v1166 = vunpack.c.l.b16 %v1144
        %v1167 = vunpack.c.h.b16 %v1144
        %v1168 = vunpack.c.l.b16 %v1145
        %v1169 = vpack.c.b16 %v1154, %v1154
        %v1170 = vpack.c.b16 %v1155, %v1155
        %v1171 = vpack.c.b16 %v1156, %v1156
        %v1172 = vpack.c.b16 %v1157, %v1157
        %v1173 = vpack.c.b16 %v1158, %v1158
        %v1174 = vpack.c.b16 %v1159, %v1159
        %v1175 = vpack.c.b16 %v1160, %v1160
        %v1176 = vpack.c.b16 %v1161, %v1161
        %v1177 = vpack.c.b16 %v1162, %v1162
        %v1178 = vpack.c.b16 %v1163, %v1163
        %v1179 = vpack.c.b16 %v1164, %v1164
        %v1180 = vpack.c.b16 %v1165, %v1165
        %v1181 = vpack.c.b16 %v1166, %v1166
        %v1182 = vpack.c.b16 %v1167, %v1167
        %v1183 = vpack.c.b16 %v1168, %v1168
        %vm1199 = vcmask 125952
        %1200 = vst.msk [vmem:[%s437] sm:$0xf] %vm1199, %v1169
        %1201 = vst.msk [vmem:[%s437 + $0x4] sm:$0xf] %vm1199, %v1170
        %1202 = vst.msk [vmem:[%s437 + $0x8] sm:$0xf] %vm1199, %v1171
        %1203 = vst.msk [vmem:[%s437 + $0xc] sm:$0xf] %vm1199, %v1172
        %1204 = vst.msk [vmem:[%s437 + $0x10] sm:$0xf] %vm1199, %v1173
        %1205 = vst.msk [vmem:[%s437 + $0x14] sm:$0xf] %vm1199, %v1174
        %1206 = vst.msk [vmem:[%s437 + $0x18] sm:$0xf] %vm1199, %v1175
        %1207 = vst.msk [vmem:[%s437 + $0x1c] sm:$0xf] %vm1199, %v1176
        %1208 = vst.msk [vmem:[%s437 + $0x20] sm:$0xf] %vm1199, %v1177
        %1209 = vst.msk [vmem:[%s437 + $0x24] sm:$0xf] %vm1199, %v1178
        %1210 = vst.msk [vmem:[%s437 + $0x28] sm:$0xf] %vm1199, %v1179
        %1211 = vst.msk [vmem:[%s437 + $0x2c] sm:$0xf] %vm1199, %v1180
        %1212 = vst.msk [vmem:[%s437 + $0x30] sm:$0xf] %vm1199, %v1181
        %1213 = vst.msk [vmem:[%s437 + $0x34] sm:$0xf] %vm1199, %v1182
        %vm1214 = vcmask 122880
        %vm1215 = vsmask.f32 256
        %vm1216 = vmand %vm1214, %vm1215
        %v1217 = vld [vmem:[%s437 + $0x38] sm:$0x1]
        %v1218 = vsel %vm1216, %v1183, %v1217
        %1219 = vst [vmem:[%s437 + $0x38] sm:$0x1] %v1218
        %p1220 = scmp.lt.s32.totalorder %s25, 1
        %s1221 = scalar_select %p1220, %s25, 1
        %s1222 = smul.addr %s1221, 15
        %s1223 = smul.addr %s1222, 4
        %s1224 = scalar_lea.vmem %s9, %s1223
        // Predicated region
        $region89: #{_lambda_.2} parent=55 // pred_check
          %p1225 = pneg %p237
        $region90: #{_lambda_.2} parent=55 // pred_check_branch
          %1227 = sbr.rel (%p1225) target = $region92
        $region91: #{_lambda_.2} parent=55 // pred_region
          _
        $region92: #{_lambda_.2} parent=55 // pred_fallthru
          _
      $region56: #{_lambda_.2} parent=5 // pred_fallthru
        _
      %p1228 = scmp.le.s32.totalorder 2, %s20
      // Predicated region
      $region93: #{_lambda_.2} parent=5 // pred_check
        %p1229 = pneg %p1228
      $region94: #{_lambda_.2} parent=5 // pred_check_branch
        %1231 = sbr.rel (%p1229) target = $region96
      $region95: #{_lambda_.2} parent=5 // pred_region
        %s1232 = ssub.s32 %s20, 2
        // Predicated region
        $region97: #{_lambda_.2} parent=95 // pred_check
          %p1233 = pneg %p243
        $region98: #{_lambda_.2} parent=95 // pred_check_branch
          %1235 = sbr.rel (%p1233) target = $region100
        $region99: #{_lambda_.2} parent=95 // pred_region
          %p1236 = scmp.lt.s32.totalorder %s26, 1
          %s1237 = scalar_select %p1236, %s26, 1
          %s1238 = smul.addr %s1237, 15
          %s1239 = smul.addr %s1238, 4
          %s1240 = scalar_lea.vmem %s9, %s1239
        $region100: #{_lambda_.2} parent=95 // pred_fallthru
          _
      $region96: #{_lambda_.2} parent=5 // pred_fallthru
        _
    $region6: #{_lambda_.2} parent=1 // loop_footer
      %s24 = sadd.s32 1, %s20
    $region7: #{_lambda_.2} parent=1 // loop_footer_branch
      %19 = sbr.rel target = $region3
    $region8: #{_lambda_.2} parent=1 // loop_exit
      _
    %1241 = vsyncpa [#allocation3], 1
    %s1242 = scalar_lea.sflag [#allocation3], 1
    %1243 = vsyncpa %s1242, 1
    %1244 = vsyncpa [#allocation5], 1
    %1245 = vsyncpa [#allocation8], 1
    %1246 = vsyncpa [#allocation11], 1
    %1247 = vsyncpa [#allocation14], 1

// kernel: _lambda_.3
$region0: #{_lambda_.3}
  #allocation0 [shape = 'u32[]', space=smem, size = 0x4, offset = 0x4, fixed_abs, tag = 'smem constant byte address 0x4 - core index']
  #allocation1 [shape = 'u32[144,128]{1,0:T(1,128)}', space=vmem, size = 0x12000, scoped, tag = 'internal scratch']
  %s0 = inlined_call_operand.vmem [shape: bf16[2,1920], index: 0, kind: input, shape index: {}]
  %s1 = inlined_call_operand.vmem [shape: bf16[1920,128], index: 1, kind: input, shape index: {}]
  %s2 = inlined_call_operand.vmem [shape: f32[1,128], index: 2, kind: input, shape index: {}]
  %s3 = inlined_call_operand.vmem [shape: bf16[128,128], index: 3, kind: input, shape index: {}]
  %s4 = inlined_call_operand.vmem [shape: f32[1,128], index: 4, kind: input, shape index: {}]
  %s5 = inlined_call_operand.hbm [shape: f32[2,128], index: 5, kind: output, shape index: {}]
  %s6 = sld [smem:[#allocation0]]
  $region30: #{_lambda_.3} parent=0
    _
  %s8 = ssub.s32 1, %s6
  %s9 = scalar_select 0, %s8, %s6
  $region1: #{_lambda_.3} parent=0
    #allocation2 [shape = 'u8[1024]{0}', space=vmem, size = 0x400, scoped, tag = 'output window, operand 0, single buffered']
    #allocation3 [shape = 's32[1]{0}', space=sflag, size = 0x4, scoped, tag = 'scoped memory for _lambda_.3']
    %10 = vsyncpa [#allocation3], 0
    // Predicated region
    $region2: #{_lambda_.3} parent=1 // pred_check
      _
    $region3: #{_lambda_.3} parent=1 // pred_check_branch
      %12 = sbr.rel (0) target = $region5
    $region4: #{_lambda_.3} parent=1 // pred_region
      _
    $region5: #{_lambda_.3} parent=1 // pred_fallthru
      _
    // Predicated region
    $region6: #{_lambda_.3} parent=1 // pred_check
      _
    $region7: #{_lambda_.3} parent=1 // pred_check_branch
      %14 = sbr.rel (0) target = $region9
    $region8: #{_lambda_.3} parent=1 // pred_region
      _
    $region9: #{_lambda_.3} parent=1 // pred_fallthru
      _
    // Predicated region
    $region10: #{_lambda_.3} parent=1 // pred_check
      _
    $region11: #{_lambda_.3} parent=1 // pred_check_branch
      %16 = sbr.rel (0) target = $region13
    $region12: #{_lambda_.3} parent=1 // pred_region
      _
    $region13: #{_lambda_.3} parent=1 // pred_fallthru
      _
    // Predicated region
    $region14: #{_lambda_.3} parent=1 // pred_check
      _
    $region15: #{_lambda_.3} parent=1 // pred_check_branch
      %18 = sbr.rel (0) target = $region17
    $region16: #{_lambda_.3} parent=1 // pred_region
      _
    $region17: #{_lambda_.3} parent=1 // pred_fallthru
      _
    // Predicated region
    $region18: #{_lambda_.3} parent=1 // pred_check
      _
    $region19: #{_lambda_.3} parent=1 // pred_check_branch
      %20 = sbr.rel (0) target = $region21
    $region20: #{_lambda_.3} parent=1 // pred_region
      _
    $region21: #{_lambda_.3} parent=1 // pred_fallthru
      _
    %v22 = vld [vmem:[%s0] sm:$0xff]
    %v23 = vld [vmem:[%s0 + $0x8] sm:$0x7f]
    %v24 = vld [vmem:[%s1] sm:$0xf]
    %v25 = vld [vmem:[%s1 + $0x4] sm:$0xf]
    %v26 = vld [vmem:[%s1 + $0x8] sm:$0xf]
    %v27 = vld [vmem:[%s1 + $0xc] sm:$0xf]
    %v28 = vld [vmem:[%s1 + $0x10] sm:$0xf]
    %v29 = vld [vmem:[%s1 + $0x14] sm:$0xf]
    %v30 = vld [vmem:[%s1 + $0x18] sm:$0xf]
    %v31 = vld [vmem:[%s1 + $0x1c] sm:$0xf]
    %v32 = vld [vmem:[%s1 + $0x20] sm:$0xf]
    %v33 = vld [vmem:[%s1 + $0x24] sm:$0xf]
    %v34 = vld [vmem:[%s1 + $0x28] sm:$0xf]
    %v35 = vld [vmem:[%s1 + $0x2c] sm:$0xf]
    %v36 = vld [vmem:[%s1 + $0x30] sm:$0xf]
    %v37 = vld [vmem:[%s1 + $0x34] sm:$0xf]
    %v38 = vld [vmem:[%s1 + $0x38] sm:$0xf]
    %v39 = vld [vmem:[%s1 + $0x3c] sm:$0xf]
    %v40 = vld [vmem:[%s1 + $0x40] sm:$0xf]
    %v41 = vld [vmem:[%s1 + $0x44] sm:$0xf]
    %v42 = vld [vmem:[%s1 + $0x48] sm:$0xf]
    %v43 = vld [vmem:[%s1 + $0x4c] sm:$0xf]
    %v44 = vld [vmem:[%s1 + $0x50] sm:$0xf]
    %v45 = vld [vmem:[%s1 + $0x54] sm:$0xf]
    %v46 = vld [vmem:[%s1 + $0x58] sm:$0xf]
    %v47 = vld [vmem:[%s1 + $0x5c] sm:$0xf]
    %v48 = vld [vmem:[%s1 + $0x60] sm:$0xf]
    %v49 = vld [vmem:[%s1 + $0x64] sm:$0xf]
    %v50 = vld [vmem:[%s1 + $0x68] sm:$0xf]
    %v51 = vld [vmem:[%s1 + $0x6c] sm:$0xf]
    %v52 = vld [vmem:[%s1 + $0x70] sm:$0xf]
    %v53 = vld [vmem:[%s1 + $0x74] sm:$0xf]
    %v54 = vld [vmem:[%s1 + $0x78] sm:$0xf]
    %v55 = vld [vmem:[%s1 + $0x7c] sm:$0xf]
    %v56 = vld [vmem:[%s1 + $0x80] sm:$0xf]
    %v57 = vld [vmem:[%s1 + $0x84] sm:$0xf]
    %v58 = vld [vmem:[%s1 + $0x88] sm:$0xf]
    %v59 = vld [vmem:[%s1 + $0x8c] sm:$0xf]
    %v60 = vld [vmem:[%s1 + $0x90] sm:$0xf]
    %v61 = vld [vmem:[%s1 + $0x94] sm:$0xf]
    %v62 = vld [vmem:[%s1 + $0x98] sm:$0xf]
    %v63 = vld [vmem:[%s1 + $0x9c] sm:$0xf]
    %v64 = vld [vmem:[%s1 + $0xa0] sm:$0xf]
    %v65 = vld [vmem:[%s1 + $0xa4] sm:$0xf]
    %v66 = vld [vmem:[%s1 + $0xa8] sm:$0xf]
    %v67 = vld [vmem:[%s1 + $0xac] sm:$0xf]
    %v68 = vld [vmem:[%s1 + $0xb0] sm:$0xf]
    %v69 = vld [vmem:[%s1 + $0xb4] sm:$0xf]
    %v70 = vld [vmem:[%s1 + $0xb8] sm:$0xf]
    %v71 = vld [vmem:[%s1 + $0xbc] sm:$0xf]
    %v72 = vld [vmem:[%s1 + $0xc0] sm:$0xf]
    %v73 = vld [vmem:[%s1 + $0xc4] sm:$0xf]
    %v74 = vld [vmem:[%s1 + $0xc8] sm:$0xf]
    %v75 = vld [vmem:[%s1 + $0xcc] sm:$0xf]
    %v76 = vld [vmem:[%s1 + $0xd0] sm:$0xf]
    %v77 = vld [vmem:[%s1 + $0xd4] sm:$0xf]
    %v78 = vld [vmem:[%s1 + $0xd8] sm:$0xf]
    %v79 = vld [vmem:[%s1 + $0xdc] sm:$0xf]
    %v80 = vld [vmem:[%s1 + $0xe0] sm:$0xf]
    %v81 = vld [vmem:[%s1 + $0xe4] sm:$0xf]
    %v82 = vld [vmem:[%s1 + $0xe8] sm:$0xf]
    %v83 = vld [vmem:[%s1 + $0xec] sm:$0xf]
    %v84 = vld [vmem:[%s1 + $0xf0] sm:$0xf]
    %v85 = vld [vmem:[%s1 + $0xf4] sm:$0xf]
    %v86 = vld [vmem:[%s1 + $0xf8] sm:$0xf]
    %v87 = vld [vmem:[%s1 + $0xfc] sm:$0xf]
    %v88 = vld [vmem:[%s1 + $0x100] sm:$0xf]
    %v89 = vld [vmem:[%s1 + $0x104] sm:$0xf]
    %v90 = vld [vmem:[%s1 + $0x108] sm:$0xf]
    %v91 = vld [vmem:[%s1 + $0x10c] sm:$0xf]
    %v92 = vld [vmem:[%s1 + $0x110] sm:$0xf]
    %v93 = vld [vmem:[%s1 + $0x114] sm:$0xf]
    %v94 = vld [vmem:[%s1 + $0x118] sm:$0xf]
    %v95 = vld [vmem:[%s1 + $0x11c] sm:$0xf]
    %v96 = vld [vmem:[%s1 + $0x120] sm:$0xf]
    %v97 = vld [vmem:[%s1 + $0x124] sm:$0xf]
    %v98 = vld [vmem:[%s1 + $0x128] sm:$0xf]
    %v99 = vld [vmem:[%s1 + $0x12c] sm:$0xf]
    %v100 = vld [vmem:[%s1 + $0x130] sm:$0xf]
    %v101 = vld [vmem:[%s1 + $0x134] sm:$0xf]
    %v102 = vld [vmem:[%s1 + $0x138] sm:$0xf]
    %v103 = vld [vmem:[%s1 + $0x13c] sm:$0xf]
    %v104 = vld [vmem:[%s1 + $0x140] sm:$0xf]
    %v105 = vld [vmem:[%s1 + $0x144] sm:$0xf]
    %v106 = vld [vmem:[%s1 + $0x148] sm:$0xf]
    %v107 = vld [vmem:[%s1 + $0x14c] sm:$0xf]
    %v108 = vld [vmem:[%s1 + $0x150] sm:$0xf]
    %v109 = vld [vmem:[%s1 + $0x154] sm:$0xf]
    %v110 = vld [vmem:[%s1 + $0x158] sm:$0xf]
    %v111 = vld [vmem:[%s1 + $0x15c] sm:$0xf]
    %v112 = vld [vmem:[%s1 + $0x160] sm:$0xf]
    %v113 = vld [vmem:[%s1 + $0x164] sm:$0xf]
    %v114 = vld [vmem:[%s1 + $0x168] sm:$0xf]
    %v115 = vld [vmem:[%s1 + $0x16c] sm:$0xf]
    %v116 = vld [vmem:[%s1 + $0x170] sm:$0xf]
    %v117 = vld [vmem:[%s1 + $0x174] sm:$0xf]
    %v118 = vld [vmem:[%s1 + $0x178] sm:$0xf]
    %v119 = vld [vmem:[%s1 + $0x17c] sm:$0xf]
    %v120 = vld [vmem:[%s1 + $0x180] sm:$0xf]
    %v121 = vld [vmem:[%s1 + $0x184] sm:$0xf]
    %v122 = vld [vmem:[%s1 + $0x188] sm:$0xf]
    %v123 = vld [vmem:[%s1 + $0x18c] sm:$0xf]
    %v124 = vld [vmem:[%s1 + $0x190] sm:$0xf]
    %v125 = vld [vmem:[%s1 + $0x194] sm:$0xf]
    %v126 = vld [vmem:[%s1 + $0x198] sm:$0xf]
    %v127 = vld [vmem:[%s1 + $0x19c] sm:$0xf]
    %v128 = vld [vmem:[%s1 + $0x1a0] sm:$0xf]
    %v129 = vld [vmem:[%s1 + $0x1a4] sm:$0xf]
    %v130 = vld [vmem:[%s1 + $0x1a8] sm:$0xf]
    %v131 = vld [vmem:[%s1 + $0x1ac] sm:$0xf]
    %v132 = vld [vmem:[%s1 + $0x1b0] sm:$0xf]
    %v133 = vld [vmem:[%s1 + $0x1b4] sm:$0xf]
    %v134 = vld [vmem:[%s1 + $0x1b8] sm:$0xf]
    %v135 = vld [vmem:[%s1 + $0x1bc] sm:$0xf]
    %v136 = vld [vmem:[%s1 + $0x1c0] sm:$0xf]
    %v137 = vld [vmem:[%s1 + $0x1c4] sm:$0xf]
    %v138 = vld [vmem:[%s1 + $0x1c8] sm:$0xf]
    %v139 = vld [vmem:[%s1 + $0x1cc] sm:$0xf]
    %v140 = vld [vmem:[%s1 + $0x1d0] sm:$0xf]
    %v141 = vld [vmem:[%s1 + $0x1d4] sm:$0xf]
    %v142 = vld [vmem:[%s1 + $0x1d8] sm:$0xf]
    %v143 = vld [vmem:[%s1 + $0x1dc] sm:$0xf]
    %v144 = vld [vmem:[%s1 + $0x1e0] sm:$0xf]
    %v145 = vld [vmem:[%s1 + $0x1e4] sm:$0xf]
    %v146 = vld [vmem:[%s1 + $0x1e8] sm:$0xf]
    %v147 = vld [vmem:[%s1 + $0x1ec] sm:$0xf]
    %v148 = vld [vmem:[%s1 + $0x1f0] sm:$0xf]
    %v149 = vld [vmem:[%s1 + $0x1f4] sm:$0xf]
    %v150 = vld [vmem:[%s1 + $0x1f8] sm:$0xf]
    %v151 = vld [vmem:[%s1 + $0x1fc] sm:$0xf]
    %v152 = vld [vmem:[%s1 + $0x200] sm:$0xf]
    %v153 = vld [vmem:[%s1 + $0x204] sm:$0xf]
    %v154 = vld [vmem:[%s1 + $0x208] sm:$0xf]
    %v155 = vld [vmem:[%s1 + $0x20c] sm:$0xf]
    %v156 = vld [vmem:[%s1 + $0x210] sm:$0xf]
    %v157 = vld [vmem:[%s1 + $0x214] sm:$0xf]
    %v158 = vld [vmem:[%s1 + $0x218] sm:$0xf]
    %v159 = vld [vmem:[%s1 + $0x21c] sm:$0xf]
    %v160 = vld [vmem:[%s1 + $0x220] sm:$0xf]
    %v161 = vld [vmem:[%s1 + $0x224] sm:$0xf]
    %v162 = vld [vmem:[%s1 + $0x228] sm:$0xf]
    %v163 = vld [vmem:[%s1 + $0x22c] sm:$0xf]
    %v164 = vld [vmem:[%s1 + $0x230] sm:$0xf]
    %v165 = vld [vmem:[%s1 + $0x234] sm:$0xf]
    %v166 = vld [vmem:[%s1 + $0x238] sm:$0xf]
    %v167 = vld [vmem:[%s1 + $0x23c] sm:$0xf]
    %v168 = vld [vmem:[%s1 + $0x240] sm:$0xf]
    %v169 = vld [vmem:[%s1 + $0x244] sm:$0xf]
    %v170 = vld [vmem:[%s1 + $0x248] sm:$0xf]
    %v171 = vld [vmem:[%s1 + $0x24c] sm:$0xf]
    %v172 = vld [vmem:[%s1 + $0x250] sm:$0xf]
    %v173 = vld [vmem:[%s1 + $0x254] sm:$0xf]
    %v174 = vld [vmem:[%s1 + $0x258] sm:$0xf]
    %v175 = vld [vmem:[%s1 + $0x25c] sm:$0xf]
    %v176 = vld [vmem:[%s1 + $0x260] sm:$0xf]
    %v177 = vld [vmem:[%s1 + $0x264] sm:$0xf]
    %v178 = vld [vmem:[%s1 + $0x268] sm:$0xf]
    %v179 = vld [vmem:[%s1 + $0x26c] sm:$0xf]
    %v180 = vld [vmem:[%s1 + $0x270] sm:$0xf]
    %v181 = vld [vmem:[%s1 + $0x274] sm:$0xf]
    %v182 = vld [vmem:[%s1 + $0x278] sm:$0xf]
    %v183 = vld [vmem:[%s1 + $0x27c] sm:$0xf]
    %v184 = vld [vmem:[%s1 + $0x280] sm:$0xf]
    %v185 = vld [vmem:[%s1 + $0x284] sm:$0xf]
    %v186 = vld [vmem:[%s1 + $0x288] sm:$0xf]
    %v187 = vld [vmem:[%s1 + $0x28c] sm:$0xf]
    %v188 = vld [vmem:[%s1 + $0x290] sm:$0xf]
    %v189 = vld [vmem:[%s1 + $0x294] sm:$0xf]
    %v190 = vld [vmem:[%s1 + $0x298] sm:$0xf]
    %v191 = vld [vmem:[%s1 + $0x29c] sm:$0xf]
    %v192 = vld [vmem:[%s1 + $0x2a0] sm:$0xf]
    %v193 = vld [vmem:[%s1 + $0x2a4] sm:$0xf]
    %v194 = vld [vmem:[%s1 + $0x2a8] sm:$0xf]
    %v195 = vld [vmem:[%s1 + $0x2ac] sm:$0xf]
    %v196 = vld [vmem:[%s1 + $0x2b0] sm:$0xf]
    %v197 = vld [vmem:[%s1 + $0x2b4] sm:$0xf]
    %v198 = vld [vmem:[%s1 + $0x2b8] sm:$0xf]
    %v199 = vld [vmem:[%s1 + $0x2bc] sm:$0xf]
    %v200 = vld [vmem:[%s1 + $0x2c0] sm:$0xf]
    %v201 = vld [vmem:[%s1 + $0x2c4] sm:$0xf]
    %v202 = vld [vmem:[%s1 + $0x2c8] sm:$0xf]
    %v203 = vld [vmem:[%s1 + $0x2cc] sm:$0xf]
    %v204 = vld [vmem:[%s1 + $0x2d0] sm:$0xf]
    %v205 = vld [vmem:[%s1 + $0x2d4] sm:$0xf]
    %v206 = vld [vmem:[%s1 + $0x2d8] sm:$0xf]
    %v207 = vld [vmem:[%s1 + $0x2dc] sm:$0xf]
    %v208 = vld [vmem:[%s1 + $0x2e0] sm:$0xf]
    %v209 = vld [vmem:[%s1 + $0x2e4] sm:$0xf]
    %v210 = vld [vmem:[%s1 + $0x2e8] sm:$0xf]
    %v211 = vld [vmem:[%s1 + $0x2ec] sm:$0xf]
    %v212 = vld [vmem:[%s1 + $0x2f0] sm:$0xf]
    %v213 = vld [vmem:[%s1 + $0x2f4] sm:$0xf]
    %v214 = vld [vmem:[%s1 + $0x2f8] sm:$0xf]
    %v215 = vld [vmem:[%s1 + $0x2fc] sm:$0xf]
    %v216 = vld [vmem:[%s1 + $0x300] sm:$0xf]
    %v217 = vld [vmem:[%s1 + $0x304] sm:$0xf]
    %v218 = vld [vmem:[%s1 + $0x308] sm:$0xf]
    %v219 = vld [vmem:[%s1 + $0x30c] sm:$0xf]
    %v220 = vld [vmem:[%s1 + $0x310] sm:$0xf]
    %v221 = vld [vmem:[%s1 + $0x314] sm:$0xf]
    %v222 = vld [vmem:[%s1 + $0x318] sm:$0xf]
    %v223 = vld [vmem:[%s1 + $0x31c] sm:$0xf]
    %v224 = vld [vmem:[%s1 + $0x320] sm:$0xf]
    %v225 = vld [vmem:[%s1 + $0x324] sm:$0xf]
    %v226 = vld [vmem:[%s1 + $0x328] sm:$0xf]
    %v227 = vld [vmem:[%s1 + $0x32c] sm:$0xf]
    %v228 = vld [vmem:[%s1 + $0x330] sm:$0xf]
    %v229 = vld [vmem:[%s1 + $0x334] sm:$0xf]
    %v230 = vld [vmem:[%s1 + $0x338] sm:$0xf]
    %v231 = vld [vmem:[%s1 + $0x33c] sm:$0xf]
    %v232 = vld [vmem:[%s1 + $0x340] sm:$0xf]
    %v233 = vld [vmem:[%s1 + $0x344] sm:$0xf]
    %v234 = vld [vmem:[%s1 + $0x348] sm:$0xf]
    %v235 = vld [vmem:[%s1 + $0x34c] sm:$0xf]
    %v236 = vld [vmem:[%s1 + $0x350] sm:$0xf]
    %v237 = vld [vmem:[%s1 + $0x354] sm:$0xf]
    %v238 = vld [vmem:[%s1 + $0x358] sm:$0xf]
    %v239 = vld [vmem:[%s1 + $0x35c] sm:$0xf]
    %v240 = vld [vmem:[%s1 + $0x360] sm:$0xf]
    %v241 = vld [vmem:[%s1 + $0x364] sm:$0xf]
    %v242 = vld [vmem:[%s1 + $0x368] sm:$0xf]
    %v243 = vld [vmem:[%s1 + $0x36c] sm:$0xf]
    %v244 = vld [vmem:[%s1 + $0x370] sm:$0xf]
    %v245 = vld [vmem:[%s1 + $0x374] sm:$0xf]
    %v246 = vld [vmem:[%s1 + $0x378] sm:$0xf]
    %v247 = vld [vmem:[%s1 + $0x37c] sm:$0xf]
    %v248 = vld [vmem:[%s1 + $0x380] sm:$0xf]
    %v249 = vld [vmem:[%s1 + $0x384] sm:$0xf]
    %v250 = vld [vmem:[%s1 + $0x388] sm:$0xf]
    %v251 = vld [vmem:[%s1 + $0x38c] sm:$0xf]
    %v252 = vld [vmem:[%s1 + $0x390] sm:$0xf]
    %v253 = vld [vmem:[%s1 + $0x394] sm:$0xf]
    %v254 = vld [vmem:[%s1 + $0x398] sm:$0xf]
    %v255 = vld [vmem:[%s1 + $0x39c] sm:$0xf]
    %v256 = vld [vmem:[%s1 + $0x3a0] sm:$0xf]
    %v257 = vld [vmem:[%s1 + $0x3a4] sm:$0xf]
    %v258 = vld [vmem:[%s1 + $0x3a8] sm:$0xf]
    %v259 = vld [vmem:[%s1 + $0x3ac] sm:$0xf]
    %v260 = vld [vmem:[%s1 + $0x3b0] sm:$0xf]
    %v261 = vld [vmem:[%s1 + $0x3b4] sm:$0xf]
    %v262 = vld [vmem:[%s1 + $0x3b8] sm:$0xf]
    %v263 = vld [vmem:[%s1 + $0x3bc] sm:$0xf]
    %v264 = vld [vmem:[%s2] sm:$0x1]
    %v266 = vlaneseq
    %v267 = vshrl.u32 %v266, 7
    %v268 = vsub.s32 0, %v267
    %v269 = vrot.slane %v264, %v268
    %v273 = vcombine.high %v22, %v22
    %v275 = vunpack.c.l.s4 1966171168
    %v276 = vunpack.c.0.s8 %v275
    %v277 = vlaneseq
    %v278 = vshrl.u32 %v277, 7
    %v279 = vsub.s32 %v276, %v278
    %v280 = vrot.slane %v22, %v279
    %v282 = vunpack.c.l.s4 1966171168
    %v283 = vunpack.c.0.s8 %v282
    %v284 = vlaneseq
    %v285 = vshrl.u32 %v284, 7
    %v286 = vsub.s32 %v283, %v285
    %v287 = vrot.slane %v273, %v286
    %v288 = vcombine.high %v280, %v280
    %v289 = vcombine.high %v287, %v287
    %v291 = vunpack.c.l.s4 1966171168
    %v292 = vunpack.c.0.s8 %v291
    %v293 = vlaneseq
    %v294 = vshrl.u32 %v293, 7
    %v295 = vsub.s32 %v292, %v294
    %v296 = vrot.slane %v280, %v295
    %v298 = vunpack.c.l.s4 1966171168
    %v299 = vunpack.c.0.s8 %v298
    %v300 = vlaneseq
    %v301 = vshrl.u32 %v300, 7
    %v302 = vsub.s32 %v299, %v301
    %v303 = vrot.slane %v287, %v302
    %v305 = vunpack.c.l.s4 1966171168
    %v306 = vunpack.c.0.s8 %v305
    %v307 = vlaneseq
    %v308 = vshrl.u32 %v307, 7
    %v309 = vsub.s32 %v306, %v308
    %v310 = vrot.slane %v288, %v309
    %v312 = vunpack.c.l.s4 1966171168
    %v313 = vunpack.c.0.s8 %v312
    %v314 = vlaneseq
    %v315 = vshrl.u32 %v314, 7
    %v316 = vsub.s32 %v313, %v315
    %v317 = vrot.slane %v289, %v316
    %v318 = vcombine.high %v296, %v296
    %v319 = vcombine.high %v303, %v303
    %v320 = vcombine.high %v310, %v310
    %v321 = vcombine.high %v317, %v317
    %v322 = vcombine.high %v23, %v23
    %v324 = vunpack.c.l.s4 1966171168
    %v325 = vunpack.c.0.s8 %v324
    %v326 = vlaneseq
    %v327 = vshrl.u32 %v326, 7
    %v328 = vsub.s32 %v325, %v327
    %v329 = vrot.slane %v23, %v328
    %v331 = vunpack.c.l.s4 1966171168
    %v332 = vunpack.c.0.s8 %v331
    %v333 = vlaneseq
    %v334 = vshrl.u32 %v333, 7
    %v335 = vsub.s32 %v332, %v334
    %v336 = vrot.slane %v322, %v335
    %v337 = vcombine.high %v329, %v329
    %v338 = vcombine.high %v336, %v336
    %v340 = vunpack.c.l.s4 1966171168
    %v341 = vunpack.c.0.s8 %v340
    %v342 = vlaneseq
    %v343 = vshrl.u32 %v342, 7
    %v344 = vsub.s32 %v341, %v343
    %v345 = vrot.slane %v329, %v344
    %v347 = vunpack.c.l.s4 1966171168
    %v348 = vunpack.c.0.s8 %v347
    %v349 = vlaneseq
    %v350 = vshrl.u32 %v349, 7
    %v351 = vsub.s32 %v348, %v350
    %v352 = vrot.slane %v336, %v351
    %v354 = vunpack.c.l.s4 1966171168
    %v355 = vunpack.c.0.s8 %v354
    %v356 = vlaneseq
    %v357 = vshrl.u32 %v356, 7
    %v358 = vsub.s32 %v355, %v357
    %v359 = vrot.slane %v337, %v358
    %v361 = vunpack.c.l.s4 1966171168
    %v362 = vunpack.c.0.s8 %v361
    %v363 = vlaneseq
    %v364 = vshrl.u32 %v363, 7
    %v365 = vsub.s32 %v362, %v364
    %v366 = vrot.slane %v338, %v365
    %v367 = vcombine.high %v345, %v345
    %v368 = vcombine.high %v352, %v352
    %v369 = vcombine.high %v359, %v359
    %v625 = vunpack.c.l.b16 %v24
    %v626 = vunpack.c.l.b16 %v25
    %v627 = vunpack.c.l.b16 %v26
    %v628 = vunpack.c.l.b16 %v27
    %v629 = vunpack.c.l.b16 %v28
    %v630 = vunpack.c.l.b16 %v29
    %v631 = vunpack.c.l.b16 %v30
    %v632 = vunpack.c.l.b16 %v31
    %v633 = vunpack.c.l.b16 %v32
    %v634 = vunpack.c.l.b16 %v33
    %v635 = vunpack.c.l.b16 %v34
    %v636 = vunpack.c.l.b16 %v35
    %v637 = vunpack.c.l.b16 %v36
    %v638 = vunpack.c.l.b16 %v37
    %v639 = vunpack.c.l.b16 %v38
    %v640 = vunpack.c.l.b16 %v39
    %v641 = vunpack.c.l.b16 %v40
    %v642 = vunpack.c.l.b16 %v41
    %v643 = vunpack.c.l.b16 %v42
    %v644 = vunpack.c.l.b16 %v43
    %v645 = vunpack.c.l.b16 %v44
    %v646 = vunpack.c.l.b16 %v45
    %v647 = vunpack.c.l.b16 %v46
    %v648 = vunpack.c.l.b16 %v47
    %v649 = vunpack.c.l.b16 %v48
    %v650 = vunpack.c.l.b16 %v49
    %v651 = vunpack.c.l.b16 %v50
    %v652 = vunpack.c.l.b16 %v51
    %v653 = vunpack.c.l.b16 %v52
    %v654 = vunpack.c.l.b16 %v53
    %v655 = vunpack.c.l.b16 %v54
    %v656 = vunpack.c.l.b16 %v55
    %v657 = vunpack.c.l.b16 %v56
    %v658 = vunpack.c.l.b16 %v57
    %v659 = vunpack.c.l.b16 %v58
    %v660 = vunpack.c.l.b16 %v59
    %v661 = vunpack.c.l.b16 %v60
    %v662 = vunpack.c.l.b16 %v61
    %v663 = vunpack.c.l.b16 %v62
    %v664 = vunpack.c.l.b16 %v63
    %v665 = vunpack.c.l.b16 %v64
    %v666 = vunpack.c.l.b16 %v65
    %v667 = vunpack.c.l.b16 %v66
    %v668 = vunpack.c.l.b16 %v67
    %v669 = vunpack.c.l.b16 %v68
    %v670 = vunpack.c.l.b16 %v69
    %v671 = vunpack.c.l.b16 %v70
    %v672 = vunpack.c.l.b16 %v71
    %v673 = vunpack.c.l.b16 %v72
    %v674 = vunpack.c.l.b16 %v73
    %v675 = vunpack.c.l.b16 %v74
    %v676 = vunpack.c.l.b16 %v75
    %v677 = vunpack.c.l.b16 %v76
    %v678 = vunpack.c.l.b16 %v77
    %v679 = vunpack.c.l.b16 %v78
    %v680 = vunpack.c.l.b16 %v79
    %v681 = vunpack.c.l.b16 %v80
    %v682 = vunpack.c.l.b16 %v81
    %v683 = vunpack.c.l.b16 %v82
    %v684 = vunpack.c.l.b16 %v83
    %v685 = vunpack.c.l.b16 %v84
    %v686 = vunpack.c.l.b16 %v85
    %v687 = vunpack.c.l.b16 %v86
    %v688 = vunpack.c.l.b16 %v87
    %v689 = vunpack.c.l.b16 %v88
    %v690 = vunpack.c.l.b16 %v89
    %v691 = vunpack.c.l.b16 %v90
    %v692 = vunpack.c.l.b16 %v91
    %v693 = vunpack.c.l.b16 %v92
    %v694 = vunpack.c.l.b16 %v93
    %v695 = vunpack.c.l.b16 %v94
    %v696 = vunpack.c.l.b16 %v95
    %v697 = vunpack.c.l.b16 %v96
    %v698 = vunpack.c.l.b16 %v97
    %v699 = vunpack.c.l.b16 %v98
    %v700 = vunpack.c.l.b16 %v99
    %v701 = vunpack.c.l.b16 %v100
    %v702 = vunpack.c.l.b16 %v101
    %v703 = vunpack.c.l.b16 %v102
    %v704 = vunpack.c.l.b16 %v103
    %v705 = vunpack.c.l.b16 %v104
    %v706 = vunpack.c.l.b16 %v105
    %v707 = vunpack.c.l.b16 %v106
    %v708 = vunpack.c.l.b16 %v107
    %v709 = vunpack.c.l.b16 %v108
    %v710 = vunpack.c.l.b16 %v109
    %v711 = vunpack.c.l.b16 %v110
    %v712 = vunpack.c.l.b16 %v111
    %v713 = vunpack.c.l.b16 %v112
    %v714 = vunpack.c.l.b16 %v113
    %v715 = vunpack.c.l.b16 %v114
    %v716 = vunpack.c.l.b16 %v115
    %v717 = vunpack.c.l.b16 %v116
    %v718 = vunpack.c.l.b16 %v117
    %v719 = vunpack.c.l.b16 %v118
    %v720 = vunpack.c.l.b16 %v119
    %v721 = vunpack.c.l.b16 %v120
    %v722 = vunpack.c.l.b16 %v121
    %v723 = vunpack.c.l.b16 %v122
    %v724 = vunpack.c.l.b16 %v123
    %v725 = vunpack.c.l.b16 %v124
    %v726 = vunpack.c.l.b16 %v125
    %v727 = vunpack.c.l.b16 %v126
    %v728 = vunpack.c.l.b16 %v127
    %v729 = vunpack.c.l.b16 %v128
    %v730 = vunpack.c.l.b16 %v129
    %v731 = vunpack.c.l.b16 %v130
    %v732 = vunpack.c.l.b16 %v131
    %v733 = vunpack.c.l.b16 %v132
    %v734 = vunpack.c.l.b16 %v133
    %v735 = vunpack.c.l.b16 %v134
    %v736 = vunpack.c.l.b16 %v135
    %v737 = vunpack.c.l.b16 %v136
    %v738 = vunpack.c.l.b16 %v137
    %v739 = vunpack.c.l.b16 %v138
    %v740 = vunpack.c.l.b16 %v139
    %v741 = vunpack.c.l.b16 %v140
    %v742 = vunpack.c.l.b16 %v141
    %v743 = vunpack.c.l.b16 %v142
    %v744 = vunpack.c.l.b16 %v143
    %v745 = vunpack.c.l.b16 %v144
    %v746 = vunpack.c.l.b16 %v145
    %v747 = vunpack.c.l.b16 %v146
    %v748 = vunpack.c.l.b16 %v147
    %v749 = vunpack.c.l.b16 %v148
    %v750 = vunpack.c.l.b16 %v149
    %v751 = vunpack.c.l.b16 %v150
    %v752 = vunpack.c.l.b16 %v151
    %v753 = vunpack.c.l.b16 %v152
    %v754 = vunpack.c.l.b16 %v153
    %v755 = vunpack.c.l.b16 %v154
    %v756 = vunpack.c.l.b16 %v155
    %v757 = vunpack.c.l.b16 %v156
    %v758 = vunpack.c.l.b16 %v157
    %v759 = vunpack.c.l.b16 %v158
    %v760 = vunpack.c.l.b16 %v159
    %v761 = vunpack.c.l.b16 %v160
    %v762 = vunpack.c.l.b16 %v161
    %v763 = vunpack.c.l.b16 %v162
    %v764 = vunpack.c.l.b16 %v163
    %v765 = vunpack.c.l.b16 %v164
    %v766 = vunpack.c.l.b16 %v165
    %v767 = vunpack.c.l.b16 %v166
    %v768 = vunpack.c.l.b16 %v167
    %v769 = vunpack.c.l.b16 %v168
    %v770 = vunpack.c.l.b16 %v169
    %v771 = vunpack.c.l.b16 %v170
    %v772 = vunpack.c.l.b16 %v171
    %v773 = vunpack.c.l.b16 %v172
    %v774 = vunpack.c.l.b16 %v173
    %v775 = vunpack.c.l.b16 %v174
    %v776 = vunpack.c.l.b16 %v175
    %v777 = vunpack.c.l.b16 %v176
    %v778 = vunpack.c.l.b16 %v177
    %v779 = vunpack.c.l.b16 %v178
    %v780 = vunpack.c.l.b16 %v179
    %v781 = vunpack.c.l.b16 %v180
    %v782 = vunpack.c.l.b16 %v181
    %v783 = vunpack.c.l.b16 %v182
    %v784 = vunpack.c.l.b16 %v183
    %v785 = vunpack.c.l.b16 %v184
    %v786 = vunpack.c.l.b16 %v185
    %v787 = vunpack.c.l.b16 %v186
    %v788 = vunpack.c.l.b16 %v187
    %v789 = vunpack.c.l.b16 %v188
    %v790 = vunpack.c.l.b16 %v189
    %v791 = vunpack.c.l.b16 %v190
    %v792 = vunpack.c.l.b16 %v191
    %v793 = vunpack.c.l.b16 %v192
    %v794 = vunpack.c.l.b16 %v193
    %v795 = vunpack.c.l.b16 %v194
    %v796 = vunpack.c.l.b16 %v195
    %v797 = vunpack.c.l.b16 %v196
    %v798 = vunpack.c.l.b16 %v197
    %v799 = vunpack.c.l.b16 %v198
    %v800 = vunpack.c.l.b16 %v199
    %v801 = vunpack.c.l.b16 %v200
    %v802 = vunpack.c.l.b16 %v201
    %v803 = vunpack.c.l.b16 %v202
    %v804 = vunpack.c.l.b16 %v203
    %v805 = vunpack.c.l.b16 %v204
    %v806 = vunpack.c.l.b16 %v205
    %v807 = vunpack.c.l.b16 %v206
    %v808 = vunpack.c.l.b16 %v207
    %v809 = vunpack.c.l.b16 %v208
    %v810 = vunpack.c.l.b16 %v209
    %v811 = vunpack.c.l.b16 %v210
    %v812 = vunpack.c.l.b16 %v211
    %v813 = vunpack.c.l.b16 %v212
    %v814 = vunpack.c.l.b16 %v213
    %v815 = vunpack.c.l.b16 %v214
    %v816 = vunpack.c.l.b16 %v215
    %v817 = vunpack.c.l.b16 %v216
    %v818 = vunpack.c.l.b16 %v217
    %v819 = vunpack.c.l.b16 %v218
    %v820 = vunpack.c.l.b16 %v219
    %v821 = vunpack.c.l.b16 %v220
    %v822 = vunpack.c.l.b16 %v221
    %v823 = vunpack.c.l.b16 %v222
    %v824 = vunpack.c.l.b16 %v223
    %v825 = vunpack.c.l.b16 %v224
    %v826 = vunpack.c.l.b16 %v225
    %v827 = vunpack.c.l.b16 %v226
    %v828 = vunpack.c.l.b16 %v227
    %v829 = vunpack.c.l.b16 %v228
    %v830 = vunpack.c.l.b16 %v229
    %v831 = vunpack.c.l.b16 %v230
    %v832 = vunpack.c.l.b16 %v231
    %v833 = vunpack.c.l.b16 %v232
    %v834 = vunpack.c.l.b16 %v233
    %v835 = vunpack.c.l.b16 %v234
    %v836 = vunpack.c.l.b16 %v235
    %v837 = vunpack.c.l.b16 %v236
    %v838 = vunpack.c.l.b16 %v237
    %v839 = vunpack.c.l.b16 %v238
    %v840 = vunpack.c.l.b16 %v239
    %v841 = vunpack.c.l.b16 %v240
    %v842 = vunpack.c.l.b16 %v241
    %v843 = vunpack.c.l.b16 %v242
    %v844 = vunpack.c.l.b16 %v243
    %v845 = vunpack.c.l.b16 %v244
    %v846 = vunpack.c.l.b16 %v245
    %v847 = vunpack.c.l.b16 %v246
    %v848 = vunpack.c.l.b16 %v247
    %v849 = vunpack.c.l.b16 %v248
    %v850 = vunpack.c.l.b16 %v249
    %v851 = vunpack.c.l.b16 %v250
    %v852 = vunpack.c.l.b16 %v251
    %v853 = vunpack.c.l.b16 %v252
    %v854 = vunpack.c.l.b16 %v253
    %v855 = vunpack.c.l.b16 %v254
    %v856 = vunpack.c.l.b16 %v255
    %v857 = vunpack.c.l.b16 %v256
    %v858 = vunpack.c.l.b16 %v257
    %v859 = vunpack.c.l.b16 %v258
    %v860 = vunpack.c.l.b16 %v259
    %v861 = vunpack.c.l.b16 %v260
    %v862 = vunpack.c.l.b16 %v261
    %v863 = vunpack.c.l.b16 %v262
    %v864 = vunpack.c.l.b16 %v263
    %v865 = vpack.c.b16 %v626, %v625
    %v866 = vpack.c.b16 %v628, %v627
    %v867 = vpack.c.b16 %v630, %v629
    %v868 = vpack.c.b16 %v632, %v631
    %v869 = vpack.c.b16 %v634, %v633
    %v870 = vpack.c.b16 %v636, %v635
    %v871 = vpack.c.b16 %v638, %v637
    %v872 = vpack.c.b16 %v640, %v639
    %v873 = vpack.c.b16 %v642, %v641
    %v874 = vpack.c.b16 %v644, %v643
    %v875 = vpack.c.b16 %v646, %v645
    %v876 = vpack.c.b16 %v648, %v647
    %v877 = vpack.c.b16 %v650, %v649
    %v878 = vpack.c.b16 %v652, %v651
    %v879 = vpack.c.b16 %v654, %v653
    %v880 = vpack.c.b16 %v656, %v655
    %v881 = vpack.c.b16 %v658, %v657
    %v882 = vpack.c.b16 %v660, %v659
    %v883 = vpack.c.b16 %v662, %v661
    %v884 = vpack.c.b16 %v664, %v663
    %v885 = vpack.c.b16 %v666, %v665
    %v886 = vpack.c.b16 %v668, %v667
    %v887 = vpack.c.b16 %v670, %v669
    %v888 = vpack.c.b16 %v672, %v671
    %v889 = vpack.c.b16 %v674, %v673
    %v890 = vpack.c.b16 %v676, %v675
    %v891 = vpack.c.b16 %v678, %v677
    %v892 = vpack.c.b16 %v680, %v679
    %v893 = vpack.c.b16 %v682, %v681
    %v894 = vpack.c.b16 %v684, %v683
    %v895 = vpack.c.b16 %v686, %v685
    %v896 = vpack.c.b16 %v688, %v687
    %v897 = vpack.c.b16 %v690, %v689
    %v898 = vpack.c.b16 %v692, %v691
    %v899 = vpack.c.b16 %v694, %v693
    %v900 = vpack.c.b16 %v696, %v695
    %v901 = vpack.c.b16 %v698, %v697
    %v902 = vpack.c.b16 %v700, %v699
    %v903 = vpack.c.b16 %v702, %v701
    %v904 = vpack.c.b16 %v704, %v703
    %v905 = vpack.c.b16 %v706, %v705
    %v906 = vpack.c.b16 %v708, %v707
    %v907 = vpack.c.b16 %v710, %v709
    %v908 = vpack.c.b16 %v712, %v711
    %v909 = vpack.c.b16 %v714, %v713
    %v910 = vpack.c.b16 %v716, %v715
    %v911 = vpack.c.b16 %v718, %v717
    %v912 = vpack.c.b16 %v720, %v719
    %v913 = vpack.c.b16 %v722, %v721
    %v914 = vpack.c.b16 %v724, %v723
    %v915 = vpack.c.b16 %v726, %v725
    %v916 = vpack.c.b16 %v728, %v727
    %v917 = vpack.c.b16 %v730, %v729
    %v918 = vpack.c.b16 %v732, %v731
    %v919 = vpack.c.b16 %v734, %v733
    %v920 = vpack.c.b16 %v736, %v735
    %v921 = vpack.c.b16 %v738, %v737
    %v922 = vpack.c.b16 %v740, %v739
    %v923 = vpack.c.b16 %v742, %v741
    %v924 = vpack.c.b16 %v744, %v743
    %v925 = vpack.c.b16 %v746, %v745
    %v926 = vpack.c.b16 %v748, %v747
    %v927 = vpack.c.b16 %v750, %v749
    %v928 = vpack.c.b16 %v752, %v751
    %v929 = vpack.c.b16 %v754, %v753
    %v930 = vpack.c.b16 %v756, %v755
    %v931 = vpack.c.b16 %v758, %v757
    %v932 = vpack.c.b16 %v760, %v759
    %v933 = vpack.c.b16 %v762, %v761
    %v934 = vpack.c.b16 %v764, %v763
    %v935 = vpack.c.b16 %v766, %v765
    %v936 = vpack.c.b16 %v768, %v767
    %v937 = vpack.c.b16 %v770, %v769
    %v938 = vpack.c.b16 %v772, %v771
    %v939 = vpack.c.b16 %v774, %v773
    %v940 = vpack.c.b16 %v776, %v775
    %v941 = vpack.c.b16 %v778, %v777
    %v942 = vpack.c.b16 %v780, %v779
    %v943 = vpack.c.b16 %v782, %v781
    %v944 = vpack.c.b16 %v784, %v783
    %v945 = vpack.c.b16 %v786, %v785
    %v946 = vpack.c.b16 %v788, %v787
    %v947 = vpack.c.b16 %v790, %v789
    %v948 = vpack.c.b16 %v792, %v791
    %v949 = vpack.c.b16 %v794, %v793
    %v950 = vpack.c.b16 %v796, %v795
    %v951 = vpack.c.b16 %v798, %v797
    %v952 = vpack.c.b16 %v800, %v799
    %v953 = vpack.c.b16 %v802, %v801
    %v954 = vpack.c.b16 %v804, %v803
    %v955 = vpack.c.b16 %v806, %v805
    %v956 = vpack.c.b16 %v808, %v807
    %v957 = vpack.c.b16 %v810, %v809
    %v958 = vpack.c.b16 %v812, %v811
    %v959 = vpack.c.b16 %v814, %v813
    %v960 = vpack.c.b16 %v816, %v815
    %v961 = vpack.c.b16 %v818, %v817
    %v962 = vpack.c.b16 %v820, %v819
    %v963 = vpack.c.b16 %v822, %v821
    %v964 = vpack.c.b16 %v824, %v823
    %v965 = vpack.c.b16 %v826, %v825
    %v966 = vpack.c.b16 %v828, %v827
    %v967 = vpack.c.b16 %v830, %v829
    %v968 = vpack.c.b16 %v832, %v831
    %v969 = vpack.c.b16 %v834, %v833
    %v970 = vpack.c.b16 %v836, %v835
    %v971 = vpack.c.b16 %v838, %v837
    %v972 = vpack.c.b16 %v840, %v839
    %v973 = vpack.c.b16 %v842, %v841
    %v974 = vpack.c.b16 %v844, %v843
    %v975 = vpack.c.b16 %v846, %v845
    %v976 = vpack.c.b16 %v848, %v847
    %v977 = vpack.c.b16 %v850, %v849
    %v978 = vpack.c.b16 %v852, %v851
    %v979 = vpack.c.b16 %v854, %v853
    %v980 = vpack.c.b16 %v856, %v855
    %v981 = vpack.c.b16 %v858, %v857
    %v982 = vpack.c.b16 %v860, %v859
    %v983 = vpack.c.b16 %v862, %v861
    %v984 = vpack.c.b16 %v864, %v863
    %1105 = vmatprep.subr.bf16.mxu0 0
    %1106 = vmatpush1.bf16.msra.mxu0 %v865
    %1107 = vmatprep.subr.bf16.mxu0 0
    %1108 = vmatpush1.bf16.msra.mxu0 %v866
    %1109 = vmatprep.subr.bf16.mxu0 0
    %1110 = vmatpush1.bf16.msra.mxu0 %v867
    %1111 = vmatprep.subr.bf16.mxu0 0
    %1112 = vmatpush1.bf16.msra.mxu0 %v868
    %1113 = vmatprep.subr.bf16.mxu0 0
    %1114 = vmatpush1.bf16.msra.mxu0 %v869
    %1115 = vmatprep.subr.bf16.mxu0 0
    %1116 = vmatpush1.bf16.msra.mxu0 %v870
    %1117 = vmatprep.subr.bf16.mxu0 0
    %1118 = vmatpush1.bf16.msra.mxu0 %v871
    %1119 = vmatprep.subr.bf16.mxu0 0
    %1120 = vmatpush1.bf16.msra.mxu0 %v872
    %1121 = vmatprep.subr.bf16.mxu0 0
    %1122 = vmatpush1.bf16.msra.mxu0 %v873
    %1123 = vmatprep.subr.bf16.mxu0 0
    %1124 = vmatpush1.bf16.msra.mxu0 %v874
    %1125 = vmatprep.subr.bf16.mxu0 0
    %1126 = vmatpush1.bf16.msra.mxu0 %v875
    %1127 = vmatprep.subr.bf16.mxu0 0
    %1128 = vmatpush1.bf16.msra.mxu0 %v876
    %1129 = vmatprep.subr.bf16.mxu0 0
    %1130 = vmatpush1.bf16.msra.mxu0 %v877
    %1131 = vmatprep.subr.bf16.mxu0 0
    %1132 = vmatpush1.bf16.msra.mxu0 %v878
    %1133 = vmatprep.subr.bf16.mxu0 0
    %1134 = vmatpush1.bf16.msra.mxu0 %v879
    %1135 = vmatprep.subr.bf16.mxu0 0
    %1136 = vmatpush1.bf16.msra.mxu0 %v880
    %1137 = vmatprep.mubr.bf16.mxu0 %v310
    %1138 = vmatmul.mubr.bf16.gmra.mrb[0].mxu0 %v296
    %v1139 = vpop.f32.mrb[0].mxu0
    %v1140 = vadd.f32 %v269, %v1139
    %v1141 = vpop.f32.mrb[0].mxu0
    %v1142 = vpop.f32.mrb[0].mxu0
    %v1143 = vpop.f32.mrb[0].mxu0
    %1144 = vdwg.mxu0
    %1145 = vmatprep.subr.bf16.mxu0 0
    %1146 = vmatpush1.bf16.msra.mxu0 %v881
    %1147 = vmatprep.subr.bf16.mxu0 0
    %1148 = vmatpush1.bf16.msra.mxu0 %v882
    %1149 = vmatprep.subr.bf16.mxu0 0
    %1150 = vmatpush1.bf16.msra.mxu0 %v883
    %1151 = vmatprep.subr.bf16.mxu0 0
    %1152 = vmatpush1.bf16.msra.mxu0 %v884
    %1153 = vmatprep.subr.bf16.mxu0 0
    %1154 = vmatpush1.bf16.msra.mxu0 %v885
    %1155 = vmatprep.subr.bf16.mxu0 0
    %1156 = vmatpush1.bf16.msra.mxu0 %v886
    %1157 = vmatprep.subr.bf16.mxu0 0
    %1158 = vmatpush1.bf16.msra.mxu0 %v887
    %1159 = vmatprep.subr.bf16.mxu0 0
    %1160 = vmatpush1.bf16.msra.mxu0 %v888
    %1161 = vmatprep.subr.bf16.mxu0 0
    %1162 = vmatpush1.bf16.msra.mxu0 %v889
    %1163 = vmatprep.subr.bf16.mxu0 0
    %1164 = vmatpush1.bf16.msra.mxu0 %v890
    %1165 = vmatprep.subr.bf16.mxu0 0
    %1166 = vmatpush1.bf16.msra.mxu0 %v891
    %1167 = vmatprep.subr.bf16.mxu0 0
    %1168 = vmatpush1.bf16.msra.mxu0 %v892
    %1169 = vmatprep.subr.bf16.mxu0 0
    %1170 = vmatpush1.bf16.msra.mxu0 %v893
    %1171 = vmatprep.subr.bf16.mxu0 0
    %1172 = vmatpush1.bf16.msra.mxu0 %v894
    %1173 = vmatprep.subr.bf16.mxu0 0
    %1174 = vmatpush1.bf16.msra.mxu0 %v895
    %1175 = vmatprep.subr.bf16.mxu0 0
    %1176 = vmatpush1.bf16.msra.mxu0 %v896
    %1177 = vmatprep.mubr.bf16.mxu0 %v320
    %1178 = vmatmul.mubr.bf16.gmra.mrb[0].mxu0 %v318
    %v1179 = vpop.f32.mrb[0].mxu0
    %v1180 = vadd.f32 %v1140, %v1179
    %v1181 = vpop.f32.mrb[0].mxu0
    %v1182 = vpop.f32.mrb[0].mxu0
    %v1183 = vpop.f32.mrb[0].mxu0
    %1184 = vdwg.mxu0
    %1185 = vmatprep.subr.bf16.mxu0 0
    %1186 = vmatpush1.bf16.msra.mxu0 %v897
    %1187 = vmatprep.subr.bf16.mxu0 0
    %1188 = vmatpush1.bf16.msra.mxu0 %v898
    %1189 = vmatprep.subr.bf16.mxu0 0
    %1190 = vmatpush1.bf16.msra.mxu0 %v899
    %1191 = vmatprep.subr.bf16.mxu0 0
    %1192 = vmatpush1.bf16.msra.mxu0 %v900
    %1193 = vmatprep.subr.bf16.mxu0 0
    %1194 = vmatpush1.bf16.msra.mxu0 %v901
    %1195 = vmatprep.subr.bf16.mxu0 0
    %1196 = vmatpush1.bf16.msra.mxu0 %v902
    %1197 = vmatprep.subr.bf16.mxu0 0
    %1198 = vmatpush1.bf16.msra.mxu0 %v903
    %1199 = vmatprep.subr.bf16.mxu0 0
    %1200 = vmatpush1.bf16.msra.mxu0 %v904
    %1201 = vmatprep.subr.bf16.mxu0 0
    %1202 = vmatpush1.bf16.msra.mxu0 %v905
    %1203 = vmatprep.subr.bf16.mxu0 0
    %1204 = vmatpush1.bf16.msra.mxu0 %v906
    %1205 = vmatprep.subr.bf16.mxu0 0
    %1206 = vmatpush1.bf16.msra.mxu0 %v907
    %1207 = vmatprep.subr.bf16.mxu0 0
    %1208 = vmatpush1.bf16.msra.mxu0 %v908
    %1209 = vmatprep.subr.bf16.mxu0 0
    %1210 = vmatpush1.bf16.msra.mxu0 %v909
    %1211 = vmatprep.subr.bf16.mxu0 0
    %1212 = vmatpush1.bf16.msra.mxu0 %v910
    %1213 = vmatprep.subr.bf16.mxu0 0
    %1214 = vmatpush1.bf16.msra.mxu0 %v911
    %1215 = vmatprep.subr.bf16.mxu0 0
    %1216 = vmatpush1.bf16.msra.mxu0 %v912
    %1217 = vmatprep.mubr.bf16.mxu0 %v317
    %1218 = vmatmul.mubr.bf16.gmra.mrb[0].mxu0 %v303
    %v1219 = vpop.f32.mrb[0].mxu0
    %v1220 = vadd.f32 %v1180, %v1219
    %v1221 = vpop.f32.mrb[0].mxu0
    %v1222 = vpop.f32.mrb[0].mxu0
    %v1223 = vpop.f32.mrb[0].mxu0
    %1224 = vdwg.mxu0
    %1225 = vmatprep.subr.bf16.mxu0 0
    %1226 = vmatpush1.bf16.msra.mxu0 %v913
    %1227 = vmatprep.subr.bf16.mxu0 0
    %1228 = vmatpush1.bf16.msra.mxu0 %v914
    %1229 = vmatprep.subr.bf16.mxu0 0
    %1230 = vmatpush1.bf16.msra.mxu0 %v915
    %1231 = vmatprep.subr.bf16.mxu0 0
    %1232 = vmatpush1.bf16.msra.mxu0 %v916
    %1233 = vmatprep.subr.bf16.mxu0 0
    %1234 = vmatpush1.bf16.msra.mxu0 %v917
    %1235 = vmatprep.subr.bf16.mxu0 0
    %1236 = vmatpush1.bf16.msra.mxu0 %v918
    %1237 = vmatprep.subr.bf16.mxu0 0
    %1238 = vmatpush1.bf16.msra.mxu0 %v919
    %1239 = vmatprep.subr.bf16.mxu0 0
    %1240 = vmatpush1.bf16.msra.mxu0 %v920
    %1241 = vmatprep.subr.bf16.mxu0 0
    %1242 = vmatpush1.bf16.msra.mxu0 %v921
    %1243 = vmatprep.subr.bf16.mxu0 0
    %1244 = vmatpush1.bf16.msra.mxu0 %v922
    %1245 = vmatprep.subr.bf16.mxu0 0
    %1246 = vmatpush1.bf16.msra.mxu0 %v923
    %1247 = vmatprep.subr.bf16.mxu0 0
    %1248 = vmatpush1.bf16.msra.mxu0 %v924
    %1249 = vmatprep.subr.bf16.mxu0 0
    %1250 = vmatpush1.bf16.msra.mxu0 %v925
    %1251 = vmatprep.subr.bf16.mxu0 0
    %1252 = vmatpush1.bf16.msra.mxu0 %v926
    %1253 = vmatprep.subr.bf16.mxu0 0
    %1254 = vmatpush1.bf16.msra.mxu0 %v927
    %1255 = vmatprep.subr.bf16.mxu0 0
    %1256 = vmatpush1.bf16.msra.mxu0 %v928
    %1257 = vmatprep.mubr.bf16.mxu0 %v321
    %1258 = vmatmul.mubr.bf16.gmra.mrb[0].mxu0 %v319
    %v1259 = vpop.f32.mrb[0].mxu0
    %v1260 = vadd.f32 %v1220, %v1259
    %v1261 = vpop.f32.mrb[0].mxu0
    %v1262 = vpop.f32.mrb[0].mxu0
    %v1263 = vpop.f32.mrb[0].mxu0
    %1264 = vdwg.mxu0
    %1265 = vmatprep.subr.bf16.mxu0 0
    %1266 = vmatpush1.bf16.msra.mxu0 %v929
    %1267 = vmatprep.subr.bf16.mxu0 0
    %1268 = vmatpush1.bf16.msra.mxu0 %v930
    %1269 = vmatprep.subr.bf16.mxu0 0
    %1270 = vmatpush1.bf16.msra.mxu0 %v931
    %1271 = vmatprep.subr.bf16.mxu0 0
    %1272 = vmatpush1.bf16.msra.mxu0 %v932
    %1273 = vmatprep.subr.bf16.mxu0 0
    %1274 = vmatpush1.bf16.msra.mxu0 %v933
    %1275 = vmatprep.subr.bf16.mxu0 0
    %1276 = vmatpush1.bf16.msra.mxu0 %v934
    %1277 = vmatprep.subr.bf16.mxu0 0
    %1278 = vmatpush1.bf16.msra.mxu0 %v935
    %1279 = vmatprep.subr.bf16.mxu0 0
    %1280 = vmatpush1.bf16.msra.mxu0 %v936
    %1281 = vmatprep.subr.bf16.mxu0 0
    %1282 = vmatpush1.bf16.msra.mxu0 %v937
    %1283 = vmatprep.subr.bf16.mxu0 0
    %1284 = vmatpush1.bf16.msra.mxu0 %v938
    %1285 = vmatprep.subr.bf16.mxu0 0
    %1286 = vmatpush1.bf16.msra.mxu0 %v939
    %1287 = vmatprep.subr.bf16.mxu0 0
    %1288 = vmatpush1.bf16.msra.mxu0 %v940
    %1289 = vmatprep.subr.bf16.mxu0 0
    %1290 = vmatpush1.bf16.msra.mxu0 %v941
    %1291 = vmatprep.subr.bf16.mxu0 0
    %1292 = vmatpush1.bf16.msra.mxu0 %v942
    %1293 = vmatprep.subr.bf16.mxu0 0
    %1294 = vmatpush1.bf16.msra.mxu0 %v943
    %1295 = vmatprep.subr.bf16.mxu0 0
    %1296 = vmatpush1.bf16.msra.mxu0 %v944
    %1297 = vmatprep.mubr.bf16.mxu0 %v359
    %1298 = vmatmul.mubr.bf16.gmra.mrb[0].mxu0 %v345
    %v1299 = vpop.f32.mrb[0].mxu0
    %v1300 = vadd.f32 %v1260, %v1299
    %v1301 = vpop.f32.mrb[0].mxu0
    %v1302 = vpop.f32.mrb[0].mxu0
    %v1303 = vpop.f32.mrb[0].mxu0
    %1304 = vdwg.mxu0
    %1305 = vmatprep.subr.bf16.mxu0 0
    %1306 = vmatpush1.bf16.msra.mxu0 %v945
    %1307 = vmatprep.subr.bf16.mxu0 0
    %1308 = vmatpush1.bf16.msra.mxu0 %v946
    %1309 = vmatprep.subr.bf16.mxu0 0
    %1310 = vmatpush1.bf16.msra.mxu0 %v947
    %1311 = vmatprep.subr.bf16.mxu0 0
    %1312 = vmatpush1.bf16.msra.mxu0 %v948
    %1313 = vmatprep.subr.bf16.mxu0 0
    %1314 = vmatpush1.bf16.msra.mxu0 %v949
    %1315 = vmatprep.subr.bf16.mxu0 0
    %1316 = vmatpush1.bf16.msra.mxu0 %v950
    %1317 = vmatprep.subr.bf16.mxu0 0
    %1318 = vmatpush1.bf16.msra.mxu0 %v951
    %1319 = vmatprep.subr.bf16.mxu0 0
    %1320 = vmatpush1.bf16.msra.mxu0 %v952
    %1321 = vmatprep.subr.bf16.mxu0 0
    %1322 = vmatpush1.bf16.msra.mxu0 %v953
    %1323 = vmatprep.subr.bf16.mxu0 0
    %1324 = vmatpush1.bf16.msra.mxu0 %v954
    %1325 = vmatprep.subr.bf16.mxu0 0
    %1326 = vmatpush1.bf16.msra.mxu0 %v955
    %1327 = vmatprep.subr.bf16.mxu0 0
    %1328 = vmatpush1.bf16.msra.mxu0 %v956
    %1329 = vmatprep.subr.bf16.mxu0 0
    %1330 = vmatpush1.bf16.msra.mxu0 %v957
    %1331 = vmatprep.subr.bf16.mxu0 0
    %1332 = vmatpush1.bf16.msra.mxu0 %v958
    %1333 = vmatprep.subr.bf16.mxu0 0
    %1334 = vmatpush1.bf16.msra.mxu0 %v959
    %1335 = vmatprep.subr.bf16.mxu0 0
    %1336 = vmatpush1.bf16.msra.mxu0 %v960
    %1337 = vmatprep.mubr.bf16.mxu0 %v369
    %1338 = vmatmul.mubr.bf16.gmra.mrb[0].mxu0 %v367
    %v1339 = vpop.f32.mrb[0].mxu0
    %v1340 = vadd.f32 %v1300, %v1339
    %v1341 = vpop.f32.mrb[0].mxu0
    %v1342 = vpop.f32.mrb[0].mxu0
    %v1343 = vpop.f32.mrb[0].mxu0
    %1344 = vdwg.mxu0
    %1345 = vmatprep.subr.bf16.mxu0 0
    %1346 = vmatpush1.bf16.msra.mxu0 %v961
    %1347 = vmatprep.subr.bf16.mxu0 0
    %1348 = vmatpush1.bf16.msra.mxu0 %v962
    %1349 = vmatprep.subr.bf16.mxu0 0
    %1350 = vmatpush1.bf16.msra.mxu0 %v963
    %1351 = vmatprep.subr.bf16.mxu0 0
    %1352 = vmatpush1.bf16.msra.mxu0 %v964
    %1353 = vmatprep.subr.bf16.mxu0 0
    %1354 = vmatpush1.bf16.msra.mxu0 %v965
    %1355 = vmatprep.subr.bf16.mxu0 0
    %1356 = vmatpush1.bf16.msra.mxu0 %v966
    %1357 = vmatprep.subr.bf16.mxu0 0
    %1358 = vmatpush1.bf16.msra.mxu0 %v967
    %1359 = vmatprep.subr.bf16.mxu0 0
    %1360 = vmatpush1.bf16.msra.mxu0 %v968
    %1361 = vmatprep.subr.bf16.mxu0 0
    %1362 = vmatpush1.bf16.msra.mxu0 %v969
    %1363 = vmatprep.subr.bf16.mxu0 0
    %1364 = vmatpush1.bf16.msra.mxu0 %v970
    %1365 = vmatprep.subr.bf16.mxu0 0
    %1366 = vmatpush1.bf16.msra.mxu0 %v971
    %1367 = vmatprep.subr.bf16.mxu0 0
    %1368 = vmatpush1.bf16.msra.mxu0 %v972
    %1369 = vmatprep.subr.bf16.mxu0 0
    %1370 = vmatpush1.bf16.msra.mxu0 %v973
    %1371 = vmatprep.subr.bf16.mxu0 0
    %1372 = vmatpush1.bf16.msra.mxu0 %v974
    %1373 = vmatprep.subr.bf16.mxu0 0
    %1374 = vmatpush1.bf16.msra.mxu0 %v975
    %1375 = vmatprep.subr.bf16.mxu0 0
    %1376 = vmatpush1.bf16.msra.mxu0 %v976
    %1377 = vmatprep.mubr.bf16.mxu0 %v366
    %1378 = vmatmul.mubr.bf16.gmra.mrb[0].mxu0 %v352
    %v1379 = vpop.f32.mrb[0].mxu0
    %v1380 = vadd.f32 %v1340, %v1379
    %v1381 = vpop.f32.mrb[0].mxu0
    %v1382 = vpop.f32.mrb[0].mxu0
    %v1383 = vpop.f32.mrb[0].mxu0
    %1384 = vdwg.mxu0
    %1385 = vmatprep.subr.bf16.mxu0 0
    %1386 = vmatpush1.bf16.msra.mxu0 %v977
    %1387 = vmatprep.subr.bf16.mxu0 0
    %1388 = vmatpush1.bf16.msra.mxu0 %v978
    %1389 = vmatprep.subr.bf16.mxu0 0
    %1390 = vmatpush1.bf16.msra.mxu0 %v979
    %1391 = vmatprep.subr.bf16.mxu0 0
    %1392 = vmatpush1.bf16.msra.mxu0 %v980
    %1393 = vmatprep.subr.bf16.mxu0 0
    %1394 = vmatpush1.bf16.msra.mxu0 %v981
    %1395 = vmatprep.subr.bf16.mxu0 0
    %1396 = vmatpush1.bf16.msra.mxu0 %v982
    %1397 = vmatprep.subr.bf16.mxu0 0
    %1398 = vmatpush1.bf16.msra.mxu0 %v983
    %1399 = vmatprep.subr.bf16.mxu0 0
    %1400 = vmatpush1.bf16.msra.mxu0 %v984
    %1401 = vmatprep.subr.bf16.mxu0 0
    %1402 = vmatpush1.bf16.msra.mxu0 0
    %1403 = vmatprep.subr.bf16.mxu0 0
    %1404 = vmatpush1.bf16.msra.mxu0 0
    %1405 = vmatprep.subr.bf16.mxu0 0
    %1406 = vmatpush1.bf16.msra.mxu0 0
    %1407 = vmatprep.subr.bf16.mxu0 0
    %1408 = vmatpush1.bf16.msra.mxu0 0
    %1409 = vmatprep.subr.bf16.mxu0 0
    %1410 = vmatpush1.bf16.msra.mxu0 0
    %1411 = vmatprep.subr.bf16.mxu0 0
    %1412 = vmatpush1.bf16.msra.mxu0 0
    %1413 = vmatprep.subr.bf16.mxu0 0
    %1414 = vmatpush1.bf16.msra.mxu0 0
    %1415 = vmatprep.subr.bf16.mxu0 0
    %1416 = vmatpush1.bf16.msra.mxu0 0
    %1417 = vmatprep.mubr.bf16.mxu0 0
    %1418 = vmatmul.mubr.bf16.gmra.mrb[0].mxu0 %v368
    %v1419 = vpop.f32.mrb[0].mxu0
    %v1420 = vadd.f32 %v1380, %v1419
    %v1421 = vpop.f32.mrb[0].mxu0
    %v1422 = vpop.f32.mrb[0].mxu0
    %v1423 = vpop.f32.mrb[0].mxu0
    %1424 = vdwg.mxu0
    %v1425 = vpack.c.bf16 %v1420, %v1420
    %v1426 = vld [vmem:[%s3] sm:$0xf]
    %v1427 = vld [vmem:[%s3 + $0x4] sm:$0xf]
    %v1428 = vld [vmem:[%s3 + $0x8] sm:$0xf]
    %v1429 = vld [vmem:[%s3 + $0xc] sm:$0xf]
    %v1430 = vld [vmem:[%s3 + $0x10] sm:$0xf]
    %v1431 = vld [vmem:[%s3 + $0x14] sm:$0xf]
    %v1432 = vld [vmem:[%s3 + $0x18] sm:$0xf]
    %v1433 = vld [vmem:[%s3 + $0x1c] sm:$0xf]
    %v1434 = vld [vmem:[%s3 + $0x20] sm:$0xf]
    %v1435 = vld [vmem:[%s3 + $0x24] sm:$0xf]
    %v1436 = vld [vmem:[%s3 + $0x28] sm:$0xf]
    %v1437 = vld [vmem:[%s3 + $0x2c] sm:$0xf]
    %v1438 = vld [vmem:[%s3 + $0x30] sm:$0xf]
    %v1439 = vld [vmem:[%s3 + $0x34] sm:$0xf]
    %v1440 = vld [vmem:[%s3 + $0x38] sm:$0xf]
    %v1441 = vld [vmem:[%s3 + $0x3c] sm:$0xf]
    %v1442 = vld [vmem:[%s4] sm:$0x1]
    %v1444 = vlaneseq
    %v1445 = vshrl.u32 %v1444, 7
    %v1446 = vsub.s32 0, %v1445
    %v1447 = vrot.slane %v1442, %v1446
    %v1465 = vunpack.c.l.b16 %v1426
    %v1466 = vunpack.c.l.b16 %v1427
    %v1467 = vunpack.c.l.b16 %v1428
    %v1468 = vunpack.c.l.b16 %v1429
    %v1469 = vunpack.c.l.b16 %v1430
    %v1470 = vunpack.c.l.b16 %v1431
    %v1471 = vunpack.c.l.b16 %v1432
    %v1472 = vunpack.c.l.b16 %v1433
    %v1473 = vunpack.c.l.b16 %v1434
    %v1474 = vunpack.c.l.b16 %v1435
    %v1475 = vunpack.c.l.b16 %v1436
    %v1476 = vunpack.c.l.b16 %v1437
    %v1477 = vunpack.c.l.b16 %v1438
    %v1478 = vunpack.c.l.b16 %v1439
    %v1479 = vunpack.c.l.b16 %v1440
    %v1480 = vunpack.c.l.b16 %v1441
    %v1481 = vpack.c.b16 %v1466, %v1465
    %v1482 = vpack.c.b16 %v1468, %v1467
    %v1483 = vpack.c.b16 %v1470, %v1469
    %v1484 = vpack.c.b16 %v1472, %v1471
    %v1485 = vpack.c.b16 %v1474, %v1473
    %v1486 = vpack.c.b16 %v1476, %v1475
    %v1487 = vpack.c.b16 %v1478, %v1477
    %v1488 = vpack.c.b16 %v1480, %v1479
    %1497 = vmatprep.subr.bf16.mxu0 0
    %1498 = vmatpush1.bf16.msra.mxu0 %v1481
    %1499 = vmatprep.subr.bf16.mxu0 0
    %1500 = vmatpush1.bf16.msra.mxu0 %v1482
    %1501 = vmatprep.subr.bf16.mxu0 0
    %1502 = vmatpush1.bf16.msra.mxu0 %v1483
    %1503 = vmatprep.subr.bf16.mxu0 0
    %1504 = vmatpush1.bf16.msra.mxu0 %v1484
    %1505 = vmatprep.subr.bf16.mxu0 0
    %1506 = vmatpush1.bf16.msra.mxu0 %v1485
    %1507 = vmatprep.subr.bf16.mxu0 0
    %1508 = vmatpush1.bf16.msra.mxu0 %v1486
    %1509 = vmatprep.subr.bf16.mxu0 0
    %1510 = vmatpush1.bf16.msra.mxu0 %v1487
    %1511 = vmatprep.subr.bf16.mxu0 0
    %1512 = vmatpush1.bf16.msra.mxu0 %v1488
    %1513 = vmatprep.subr.bf16.mxu0 0
    %1514 = vmatpush1.bf16.msra.mxu0 0
    %1515 = vmatprep.subr.bf16.mxu0 0
    %1516 = vmatpush1.bf16.msra.mxu0 0
    %1517 = vmatprep.subr.bf16.mxu0 0
    %1518 = vmatpush1.bf16.msra.mxu0 0
    %1519 = vmatprep.subr.bf16.mxu0 0
    %1520 = vmatpush1.bf16.msra.mxu0 0
    %1521 = vmatprep.subr.bf16.mxu0 0
    %1522 = vmatpush1.bf16.msra.mxu0 0
    %1523 = vmatprep.subr.bf16.mxu0 0
    %1524 = vmatpush1.bf16.msra.mxu0 0
    %1525 = vmatprep.subr.bf16.mxu0 0
    %1526 = vmatpush1.bf16.msra.mxu0 0
    %1527 = vmatprep.subr.bf16.mxu0 0
    %1528 = vmatpush1.bf16.msra.mxu0 0
    %1529 = vmatprep.mubr.bf16.mxu0 0
    %1530 = vmatmul.mubr.bf16.gmra.mrb[0].mxu0 %v1425
    %v1531 = vpop.f32.mrb[0].mxu0
    %v1532 = vadd.f32 %v1447, %v1531
    %v1533 = vpop.f32.mrb[0].mxu0
    %v1534 = vpop.f32.mrb[0].mxu0
    %v1535 = vpop.f32.mrb[0].mxu0
    %1536 = vdwg.mxu0
    %1537 = vst [vmem:[#allocation2] sm:$0x3] %v1532
    // Predicated region
    $region22: #{_lambda_.3} parent=1 // pred_check
      _
    $region23: #{_lambda_.3} parent=1 // pred_check_branch
      %1539 = sbr.rel (0) target = $region25
    $region24: #{_lambda_.3} parent=1 // pred_region
      %s1541 = ssub.s32 32, 32
      %1542 = vsyncadd [#allocation3], %s1541
      %s1544 = sshll.u32 [#allocation2], 4
      %s1545 = int_to_ptr.vmem [resolvable:$true] %s1544
      %1547 = dma.vmem_to_hbm [thread:$0]  %s1545, 32, %s5, [#allocation3]
    $region25: #{_lambda_.3} parent=1 // pred_fallthru
      _
    // Predicated region
    $region26: #{_lambda_.3} parent=1 // pred_check
      _
    $region27: #{_lambda_.3} parent=1 // pred_check_branch
      %1549 = sbr.rel (0) target = $region29
    $region28: #{_lambda_.3} parent=1 // pred_region
      %1550 = dma.done [#allocation3], 32
    $region29: #{_lambda_.3} parent=1 // pred_fallthru
      _
    %1551 = vsyncpa [#allocation3], 1

</llo_original>
